<compile_context>
chip_gen: v7x
topology: tpu7x:2x2x1
jax: 0.10.0
libtpu: 0.0.40
codegen_flags: <defaults>
</compile_context>

<pallas_src>
import functools

import jax
import jax.numpy as jnp
from jax.experimental import pallas as pl
from jax.experimental.pallas import tpu as pltpu

LANE = 128          # vreg lane width (last-dim granularity)
SUBLANE_BF16 = 16   # bf16 native sublane tile is (16, 128)


def _round_up(x, m):
    return (x + m - 1) // m * m


def _pad2d(a, rows, cols):
    r, c = a.shape
    if r == rows and c == cols:
        return a
    return jnp.pad(a, ((0, rows - r), (0, cols - c)))


@functools.lru_cache(maxsize=1)
def _vmem_cap_bytes():
    """~75% of physical VMEM: ~96 MiB on v5e/v6e (128 MiB), ~48 MiB on v7x (64 MiB)."""
    try:
        phys = int(pltpu.get_tpu_info().vmem_capacity_bytes)
    except Exception:                     # fall back to the smallest (v7x) budget
        phys = 64 << 20
    return phys * 3 // 4


def _choose_m_tiling(m):
    """Pick (Mp, tm): largest tile with <= 25% pad waste; bf16 16-row granularity."""
    base = _round_up(max(m, SUBLANE_BF16), SUBLANE_BF16)
    for t in (1024, 512, 256, 128, 64, 32, 16):
        padded = _round_up(base, t)
        if padded <= base + max(base // 4, 0) or t == SUBLANE_BF16:
            return padded, t
    return base, SUBLANE_BF16  # unreachable


def _largest_divisor_tile(dim, cap=512):
    """Largest of {512, 256, 128} (<= cap) dividing dim; dim is a multiple of 128."""
    for t in (512, 256, 128):
        if t <= cap and dim % t == 0:
            return t
    return 128


# ---------------------------------------------------------------------------
# Kernels.  Grid = (M tiles, N tiles, K tiles); K last ("arbitrary"),
# M/N "parallel".  f32 VMEM accumulators; bias added in the finalize epilogue.
# ---------------------------------------------------------------------------
def _linear_kernel(x_ref, w_ref, b_ref, o_ref, acc_ref):
    k = pl.program_id(2)

    @pl.when(k == 0)
    def _init():
        acc_ref[...] = jnp.zeros_like(acc_ref)

    acc_ref[...] += jnp.dot(x_ref[...], w_ref[...],
                            preferred_element_type=jnp.float32)

    @pl.when(k == pl.num_programs(2) - 1)
    def _finalize():
        o_ref[...] = (acc_ref[...] + b_ref[...]).astype(o_ref.dtype)


def _swiglu_kernel(x_ref, w1_ref, b1_ref, w2_ref, b2_ref, o_ref,
                   acc1_ref, acc2_ref, *, approx_sigmoid):
    k = pl.program_id(2)

    @pl.when(k == 0)
    def _init():
        acc1_ref[...] = jnp.zeros_like(acc1_ref)
        acc2_ref[...] = jnp.zeros_like(acc2_ref)

    x = x_ref[...]  # one x tile feeds both MXU matmuls (x read once from HBM)
    acc1_ref[...] += jnp.dot(x, w1_ref[...], preferred_element_type=jnp.float32)
    acc2_ref[...] += jnp.dot(x, w2_ref[...], preferred_element_type=jnp.float32)

    @pl.when(k == pl.num_programs(2) - 1)
    def _finalize():
        # sigmoid = 1 / (1 + exp(-h)): exp and reciprocal both route to the EUP
        # slot; keeps the VALU slot (already carrying the muls) from binding.
        def sig(h):
            return pl.reciprocal(1.0 + jnp.exp(-h), approx=approx_sigmoid)

        h1 = acc1_ref[...] + b1_ref[...]
        h2 = acc2_ref[...] + b2_ref[...]
        o_ref[...] = (h1 * sig(h1) * sig(h2)).astype(o_ref.dtype)


# ---------------------------------------------------------------------------
# Shared tiled launcher on pre-padded operands.
#   x_p:   (Mp, Kp) activation slab (Mp % tm == 0, Kp % 128 == 0)
#   pairs: [(w_p, b_p), ...] with w_p (Kp, Np), b_p (1, Np) f32, pre-padded.
# Returns the padded (Mp, Np) output slab (no slicing here).
# ---------------------------------------------------------------------------
def _fused_matmul_call(kernel, x_p, pairs, *, out_dtype, tm,
                       transcendentals_per_out=0):
    Mp, Kp = x_p.shape
    Np = pairs[0][0].shape[1]
    assert pairs[0][0].shape[0] == Kp and Np % LANE == 0 and Kp % LANE == 0

    tn = _largest_divisor_tile(Np, cap=512)
    tk = _largest_divisor_tile(Kp, cap=512)

    # v7x has 2 TensorCores sharded over the "parallel" axes: if the (M, N)
    # grid degenerates to a single tile, split N so both cores get work.
    if Mp // tm == 1 and Np // tn == 1 and Np >= 2 * LANE:
        for t in (512, 256, 128):
            if Np % t == 0 and Np // t >= 2:
                tn = t
                break

    grid_m, grid_n, grid_k = Mp // tm, Np // tn, Kp // tk
    n_pairs = len(pairs)

    in_specs = [pl.BlockSpec((tm, tk), lambda i, j, k: (i, k))]
    operands = [x_p]
    for w_p, b_p in pairs:
        operands.append(w_p)
        operands.append(b_p)
        in_specs.append(pl.BlockSpec((tk, tn), lambda i, j, k: (k, j)))
        in_specs.append(pl.BlockSpec((1, tn), lambda i, j, k: (0, j)))

    x_item = x_p.dtype.itemsize
    w_item = pairs[0][0].dtype.itemsize
    out_item = jnp.dtype(out_dtype).itemsize

    cost = pl.CostEstimate(
        flops=2 * n_pairs * Mp * Kp * Np,
        transcendentals=transcendentals_per_out * Mp * Np,
        bytes_accessed=(grid_n * Mp * Kp * x_item                       # x re-read per N tile
                        + n_pairs * grid_m * (Kp * Np * w_item + Np * 4)  # w re-read per M tile
                        + Mp * Np * out_item),
    )

    # Double-buffered x/w/b/out blocks + f32 accumulators; budget per chip.
    vmem_bytes = (2 * tm * tk * x_item
                  + 2 * n_pairs * (tk * tn * w_item + tn * 4)
                  + 2 * tm * tn * out_item
                  + n_pairs * tm * tn * 4)
    cap = _vmem_cap_bytes()
    vmem_limit = int(min(max(vmem_bytes + (4 << 20), 32 << 20), cap))

    return pl.pallas_call(
        kernel,
        out_shape=jax.ShapeDtypeStruct((Mp, Np), out_dtype),
        grid_spec=pltpu.PrefetchScalarGridSpec(
            num_scalar_prefetch=0,
            grid=(grid_m, grid_n, grid_k),
            in_specs=in_specs,
            out_specs=pl.BlockSpec((tm, tn), lambda i, j, k: (i, j)),
            scratch_shapes=[pltpu.VMEM((tm, tn), jnp.float32)
                            for _ in range(n_pairs)],
        ),
        compiler_params=pltpu.CompilerParams(
            dimension_semantics=("parallel", "parallel", "arbitrary"),
            vmem_limit_bytes=vmem_limit,
        ),
        cost_estimate=cost,
    )(*operands)


# ---------------------------------------------------------------------------
# Parameter preparation (done ONCE, outside the per-forward path): pad every
# weight to (Kp, Np) in MXU dtype and every bias to a (1, Np) f32 row.
# ---------------------------------------------------------------------------
def prepare_params(params, *, mxu_dtype=jnp.bfloat16):
    def prep_pair(w, b):
        K, N = w.shape
        Kp, Np = _round_up(K, LANE), _round_up(N, LANE)
        w_p = _pad2d(jnp.asarray(w), Kp, Np).astype(mxu_dtype)
        b_p = _pad2d(jnp.asarray(b, dtype=jnp.float32).reshape(1, -1), 1, Np)
        return w_p, b_p

    layers = []
    for layer in params["layers"]:
        w1, b1, w2, b2 = layer["swiglu"]
        layers.append({
            "fc": prep_pair(*layer["fc"]),
            "swiglu": [prep_pair(w1, b1), prep_pair(w2, b2)],
        })
    prepared = {"layers": layers, "fc": prep_pair(*params["fc"])}
    out_dims = params["fc"][0].shape[1]
    return prepared, out_dims


# ---------------------------------------------------------------------------
# Forward: (Linear -> SwiGLU) x (n_layers-1), then final Linear.
# Intermediate activations stay as one padded bf16 (Mp, Np) slab end-to-end.
# ---------------------------------------------------------------------------
@functools.partial(jax.jit,
                   static_argnames=("out_dims", "act_dtype", "approx_sigmoid"))
def mlp_forward(x, prepared, *, out_dims, act_dtype=jnp.bfloat16,
                approx_sigmoid=True):
    orig_lead = x.shape[:-1]
    x2d = x.reshape(-1, x.shape[-1])
    M, K = x2d.shape

    if prepared["layers"]:
        Kp0 = prepared["layers"][0]["fc"][0].shape[0]
    else:
        Kp0 = prepared["fc"][0].shape[0]

    Mp, tm = _choose_m_tiling(M)
    # Pad x once (zero pad keeps the math exact for valid rows/cols).
    x_p = _pad2d(x2d.astype(act_dtype), Mp, Kp0)

    swiglu_kernel = functools.partial(_swiglu_kernel,
                                      approx_sigmoid=approx_sigmoid)

    for layer in prepared["layers"]:
        x_p = _fused_matmul_call(_linear_kernel, x_p, [layer["fc"]],
                                 out_dtype=act_dtype, tm=tm)
        x_p = _fused_matmul_call(swiglu_kernel, x_p, layer["swiglu"],
                                 out_dtype=act_dtype, tm=tm,
                                 transcendentals_per_out=4)

    out_p = _fused_matmul_call(_linear_kernel, x_p, [prepared["fc"]],
                               out_dtype=x.dtype, tm=tm)
    # Single slice/reshape at the very end (dropout after fc is identity in eval).
    return out_p[:M, :out_dims].reshape(orig_lead + (out_dims,))


# ---------------------------------------------------------------------------
# Pure-JAX reference matching the PyTorch forward (eval mode, mask=None).
# ---------------------------------------------------------------------------
def mlp_forward_ref(x, params):
    for layer in params["layers"]:
        w, b = layer["fc"]
        x = x @ w + b
        w1, b1, w2, b2 = layer["swiglu"]
        h1 = x @ w1 + b1
        h2 = x @ w2 + b2
        x = (h1 * jax.nn.sigmoid(h1)) * jax.nn.sigmoid(h2)
    w, b = params["fc"]
    return x @ w + b


def _init_linear(key, d_in, d_out):
    """Mimics nn.Linear init; weight stored as (in, out) = PyTorch weight.T."""
    kw, kb = jax.random.split(key)
    bound = 1.0 / (d_in ** 0.5)
    w = jax.random.uniform(kw, (d_in, d_out), jnp.float32, -bound, bound)
    b = jax.random.uniform(kb, (d_out,), jnp.float32, -bound, bound)
    return w, b


if __name__ == "__main__":
    key = jax.random.PRNGKey(0)
    batch, seq = 2, 8
    n_layers, in_dims, hidden_dims, out_dims = 3, 32, 48, 16

    keys = jax.random.split(key, 1 + 3 * (n_layers - 1) + 1)
    x = jax.random.normal(keys[0], (batch, seq, in_dims), dtype=jnp.float32)

    layers = []
    ki = 1
    d = in_dims
    for _ in range(n_layers - 1):
        fc = _init_linear(keys[ki], d, hidden_dims); ki += 1
        w1, b1 = _init_linear(keys[ki], hidden_dims, hidden_dims); ki += 1
        w2, b2 = _init_linear(keys[ki], hidden_dims, hidden_dims); ki += 1
        layers.append({"fc": fc, "swiglu": (w1, b1, w2, b2)})
        d = hidden_dims
    params = {"layers": layers, "fc": _init_linear(keys[ki], hidden_dims, out_dims)}

    y_ref = mlp_forward_ref(x, params)

    # Near-exact path: f32 weights + f32 activations + exact sigmoid.
    prepared_f32, od = prepare_params(params, mxu_dtype=jnp.float32)
    y_f32 = mlp_forward(x, prepared_f32, out_dims=od,
                        act_dtype=jnp.float32, approx_sigmoid=False)
    jax.block_until_ready(y_f32)
    assert y_f32.shape == (batch, seq, out_dims)
    assert jnp.allclose(y_f32, y_ref, atol=1e-3, rtol=1e-3), "f32 path mismatch"

    # Fast path (default): bf16 weights + bf16 activations, f32 accumulation,
    # approximate (EUP) sigmoid.
    prepared_bf16, od = prepare_params(params)
    y = mlp_forward(x, prepared_bf16, out_dims=od)
    jax.block_until_ready(y)
    assert y.shape == (batch, seq, out_dims)
    assert jnp.allclose(y, y_ref, atol=4e-2, rtol=4e-2), "bf16 path mismatch"

    print("KERNEL_OK")
</pallas_src>

<mosaic_0001>
module attributes {stable_mosaic.version = 11 : i64} {
  func.func @_swiglu_kernel(%arg0: i32, %arg1: i32, %arg2: i32, %arg3: memref<16x128xf32, #tpu.memory_space<vmem>>, %arg4: memref<128x128xf32, #tpu.memory_space<vmem>>, %arg5: memref<1x128xf32, #tpu.memory_space<vmem>>, %arg6: memref<128x128xf32, #tpu.memory_space<vmem>>, %arg7: memref<1x128xf32, #tpu.memory_space<vmem>>, %arg8: memref<16x128xf32, #tpu.memory_space<vmem>>, %arg9: memref<16x128xf32, #tpu.memory_space<vmem>>, %arg10: memref<16x128xf32, #tpu.memory_space<vmem>>) attributes {dimension_semantics = [#tpu.dimension_semantics<parallel>, #tpu.dimension_semantics<parallel>, #tpu.dimension_semantics<arbitrary>], iteration_bounds = array<i64: 1, 1, 1>, scalar_prefetch = 0 : i64, scratch_operands = 2 : i64, tpu.core_type = #tpu.core_type<tc>, window_params = [{transform_indices = @transform_0, window_bounds = array<i64: 16, 128>}, {transform_indices = @transform_1, window_bounds = array<i64: 128, 128>}, {transform_indices = @transform_2, window_bounds = array<i64: 1, 128>}, {transform_indices = @transform_3, window_bounds = array<i64: 128, 128>}, {transform_indices = @transform_4, window_bounds = array<i64: 1, 128>}, {transform_indices = @transform_5, window_bounds = array<i64: 16, 128>}]} {
    %c0_i32 = arith.constant 0 : i32
    %0 = arith.cmpi eq, %arg2, %c0_i32 : i32
    %1 = arith.extui %0 : i1 to i32
    %c0_i32_0 = arith.constant 0 : i32
    %2 = arith.cmpi ne, %1, %c0_i32_0 : i32
    scf.if %2 {
      %cst_17 = arith.constant 0.000000e+00 : f32
      %17 = vector.broadcast %cst_17 : f32 to vector<16x128xf32>
      %c0_18 = arith.constant 0 : index
      %c0_19 = arith.constant 0 : index
      %18 = vector.load %arg9[%c0_18, %c0_19] : memref<16x128xf32, #tpu.memory_space<vmem>>, vector<16x128xf32>
      tpu.vector_store %arg9[%c0_18, %c0_19], %17 {strides = array<i32>} : memref<16x128xf32, #tpu.memory_space<vmem>>, vector<16x128xf32>,
      %cst_20 = arith.constant 0.000000e+00 : f32
      %19 = vector.broadcast %cst_20 : f32 to vector<16x128xf32>
      %c0_21 = arith.constant 0 : index
      %c0_22 = arith.constant 0 : index
      %20 = vector.load %arg10[%c0_21, %c0_22] : memref<16x128xf32, #tpu.memory_space<vmem>>, vector<16x128xf32>
      tpu.vector_store %arg10[%c0_21, %c0_22], %19 {strides = array<i32>} : memref<16x128xf32, #tpu.memory_space<vmem>>, vector<16x128xf32>,
    } else {
    }
    %c0 = arith.constant 0 : index
    %c0_1 = arith.constant 0 : index
    %3 = vector.load %arg3[%c0, %c0_1] : memref<16x128xf32, #tpu.memory_space<vmem>>, vector<16x128xf32>
    %c0_2 = arith.constant 0 : index
    %c0_3 = arith.constant 0 : index
    %4 = vector.load %arg9[%c0_2, %c0_3] : memref<16x128xf32, #tpu.memory_space<vmem>>, vector<16x128xf32>
    %c0_4 = arith.constant 0 : index
    %c0_5 = arith.constant 0 : index
    %5 = vector.load %arg4[%c0_4, %c0_5] : memref<128x128xf32, #tpu.memory_space<vmem>>, vector<128x128xf32>
    %cst = arith.constant dense<0.000000e+00> : vector<16x128xf32>
    %6 = tpu.matmul %3, %5, %cst {dimension_numbers = #tpu.dot_dimension_numbers<[1], [0], [0], [1], [0, 0, 1, 1], [], []>} : vector<16x128xf32>, vector<128x128xf32>, vector<16x128xf32> -> vector<16x128xf32>
    %7 = arith.addf %4, %6 : vector<16x128xf32>
    %c0_6 = arith.constant 0 : index
    %c0_7 = arith.constant 0 : index
    %8 = vector.load %arg9[%c0_6, %c0_7] : memref<16x128xf32, #tpu.memory_space<vmem>>, vector<16x128xf32>
    tpu.vector_store %arg9[%c0_6, %c0_7], %7 {strides = array<i32>} : memref<16x128xf32, #tpu.memory_space<vmem>>, vector<16x128xf32>,
    %c0_8 = arith.constant 0 : index
    %c0_9 = arith.constant 0 : index
    %9 = vector.load %arg10[%c0_8, %c0_9] : memref<16x128xf32, #tpu.memory_space<vmem>>, vector<16x128xf32>
    %c0_10 = arith.constant 0 : index
    %c0_11 = arith.constant 0 : index
    %10 = vector.load %arg6[%c0_10, %c0_11] : memref<128x128xf32, #tpu.memory_space<vmem>>, vector<128x128xf32>
    %cst_12 = arith.constant dense<0.000000e+00> : vector<16x128xf32>
    %11 = tpu.matmul %3, %10, %cst_12 {dimension_numbers = #tpu.dot_dimension_numbers<[1], [0], [0], [1], [0, 0, 1, 1], [], []>} : vector<16x128xf32>, vector<128x128xf32>, vector<16x128xf32> -> vector<16x128xf32>
    %12 = arith.addf %9, %11 : vector<16x128xf32>
    %c0_13 = arith.constant 0 : index
    %c0_14 = arith.constant 0 : index
    %13 = vector.load %arg10[%c0_13, %c0_14] : memref<16x128xf32, #tpu.memory_space<vmem>>, vector<16x128xf32>
    tpu.vector_store %arg10[%c0_13, %c0_14], %12 {strides = array<i32>} : memref<16x128xf32, #tpu.memory_space<vmem>>, vector<16x128xf32>,
    %c0_i32_15 = arith.constant 0 : i32
    %14 = arith.cmpi eq, %arg2, %c0_i32_15 : i32
    %15 = arith.extui %14 : i1 to i32
    %c0_i32_16 = arith.constant 0 : i32
    %16 = arith.cmpi ne, %15, %c0_i32_16 : i32
    scf.if %16 {
      %c0_17 = arith.constant 0 : index
      %c0_18 = arith.constant 0 : index
      %17 = vector.load %arg9[%c0_17, %c0_18] : memref<16x128xf32, #tpu.memory_space<vmem>>, vector<16x128xf32>
      %c0_19 = arith.constant 0 : index
      %c0_20 = arith.constant 0 : index
      %18 = vector.load %arg5[%c0_19, %c0_20] : memref<1x128xf32, #tpu.memory_space<vmem>>, vector<1x128xf32>
      %19 = vector.broadcast %18 : vector<1x128xf32> to vector<16x128xf32>
      %20 = arith.addf %17, %19 : vector<16x128xf32>
      %c0_21 = arith.constant 0 : index
      %c0_22 = arith.constant 0 : index
      %21 = vector.load %arg10[%c0_21, %c0_22] : memref<16x128xf32, #tpu.memory_space<vmem>>, vector<16x128xf32>
      %c0_23 = arith.constant 0 : index
      %c0_24 = arith.constant 0 : index
      %22 = vector.load %arg7[%c0_23, %c0_24] : memref<1x128xf32, #tpu.memory_space<vmem>>, vector<1x128xf32>
      %23 = vector.broadcast %22 : vector<1x128xf32> to vector<16x128xf32>
      %24 = arith.addf %21, %23 : vector<16x128xf32>
      %cst_25 = arith.constant 0.000000e+00 : f32
      %25 = vector.broadcast %cst_25 : f32 to vector<16x128xf32>
      %26 = arith.subf %25, %20 : vector<16x128xf32>
      %27 = math.exp %26 : vector<16x128xf32>
      %cst_26 = arith.constant 1.000000e+00 : f32
      %28 = vector.broadcast %cst_26 : f32 to vector<16x128xf32>
      %29 = arith.addf %28, %27 : vector<16x128xf32>
      %30 = tpu.reciprocal %29 : vector<16x128xf32> -> vector<16x128xf32>
      %31 = arith.mulf %20, %30 : vector<16x128xf32>
      %cst_27 = arith.constant 0.000000e+00 : f32
      %32 = vector.broadcast %cst_27 : f32 to vector<16x128xf32>
      %33 = arith.subf %32, %24 : vector<16x128xf32>
      %34 = math.exp %33 : vector<16x128xf32>
      %cst_28 = arith.constant 1.000000e+00 : f32
      %35 = vector.broadcast %cst_28 : f32 to vector<16x128xf32>
      %36 = arith.addf %35, %34 : vector<16x128xf32>
      %37 = tpu.reciprocal %36 : vector<16x128xf32> -> vector<16x128xf32>
      %38 = arith.mulf %31, %37 : vector<16x128xf32>
      %c0_29 = arith.constant 0 : index
      %c0_30 = arith.constant 0 : index
      %39 = vector.load %arg8[%c0_29, %c0_30] : memref<16x128xf32, #tpu.memory_space<vmem>>, vector<16x128xf32>
      tpu.vector_store %arg8[%c0_29, %c0_30], %38 {strides = array<i32>} : memref<16x128xf32, #tpu.memory_space<vmem>>, vector<16x128xf32>,
    } else {
    }
    return
  }
  func.func @transform_0(%arg0: i32, %arg1: i32, %arg2: i32) -> (i32, i32) {
    %c0_i32 = arith.constant 0 : i32
    return %arg0, %arg2 : i32, i32
  }
  func.func @transform_1(%arg0: i32, %arg1: i32, %arg2: i32) -> (i32, i32) {
    %c0_i32 = arith.constant 0 : i32
    return %arg2, %arg1 : i32, i32
  }
  func.func @transform_2(%arg0: i32, %arg1: i32, %arg2: i32) -> (i32, i32) {
    %c0_i32 = arith.constant 0 : i32
    %c0_i32_0 = arith.constant 0 : i32
    return %c0_i32, %arg1 : i32, i32
  }
  func.func @transform_3(%arg0: i32, %arg1: i32, %arg2: i32) -> (i32, i32) {
    %c0_i32 = arith.constant 0 : i32
    return %arg2, %arg1 : i32, i32
  }
  func.func @transform_4(%arg0: i32, %arg1: i32, %arg2: i32) -> (i32, i32) {
    %c0_i32 = arith.constant 0 : i32
    %c0_i32_0 = arith.constant 0 : i32
    return %c0_i32, %arg1 : i32, i32
  }
  func.func @transform_5(%arg0: i32, %arg1: i32, %arg2: i32) -> (i32, i32) {
    %c0_i32 = arith.constant 0 : i32
    return %arg0, %arg1 : i32, i32
  }
}

module attributes {stable_mosaic.version = 11 : i64} {
  func.func @_linear_kernel(%arg0: i32, %arg1: i32, %arg2: i32, %arg3: memref<16x128xf32, #tpu.memory_space<vmem>>, %arg4: memref<128x128xf32, #tpu.memory_space<vmem>>, %arg5: memref<1x128xf32, #tpu.memory_space<vmem>>, %arg6: memref<16x128xf32, #tpu.memory_space<vmem>>, %arg7: memref<16x128xf32, #tpu.memory_space<vmem>>) attributes {dimension_semantics = [#tpu.dimension_semantics<parallel>, #tpu.dimension_semantics<parallel>, #tpu.dimension_semantics<arbitrary>], iteration_bounds = array<i64: 1, 1, 1>, scalar_prefetch = 0 : i64, scratch_operands = 1 : i64, tpu.core_type = #tpu.core_type<tc>, window_params = [{transform_indices = @transform_0, window_bounds = array<i64: 16, 128>}, {transform_indices = @transform_1, window_bounds = array<i64: 128, 128>}, {transform_indices = @transform_2, window_bounds = array<i64: 1, 128>}, {transform_indices = @transform_3, window_bounds = array<i64: 16, 128>}]} {
    %c0_i32 = arith.constant 0 : i32
    %0 = arith.cmpi eq, %arg2, %c0_i32 : i32
    %1 = arith.extui %0 : i1 to i32
    %c0_i32_0 = arith.constant 0 : i32
    %2 = arith.cmpi ne, %1, %c0_i32_0 : i32
    scf.if %2 {
      %cst_10 = arith.constant 0.000000e+00 : f32
      %12 = vector.broadcast %cst_10 : f32 to vector<16x128xf32>
      %c0_11 = arith.constant 0 : index
      %c0_12 = arith.constant 0 : index
      %13 = vector.load %arg7[%c0_11, %c0_12] : memref<16x128xf32, #tpu.memory_space<vmem>>, vector<16x128xf32>
      tpu.vector_store %arg7[%c0_11, %c0_12], %12 {strides = array<i32>} : memref<16x128xf32, #tpu.memory_space<vmem>>, vector<16x128xf32>,
    } else {
    }
    %c0 = arith.constant 0 : index
    %c0_1 = arith.constant 0 : index
    %3 = vector.load %arg7[%c0, %c0_1] : memref<16x128xf32, #tpu.memory_space<vmem>>, vector<16x128xf32>
    %c0_2 = arith.constant 0 : index
    %c0_3 = arith.constant 0 : index
    %4 = vector.load %arg3[%c0_2, %c0_3] : memref<16x128xf32, #tpu.memory_space<vmem>>, vector<16x128xf32>
    %c0_4 = arith.constant 0 : index
    %c0_5 = arith.constant 0 : index
    %5 = vector.load %arg4[%c0_4, %c0_5] : memref<128x128xf32, #tpu.memory_space<vmem>>, vector<128x128xf32>
    %cst = arith.constant dense<0.000000e+00> : vector<16x128xf32>
    %6 = tpu.matmul %4, %5, %cst {dimension_numbers = #tpu.dot_dimension_numbers<[1], [0], [0], [1], [0, 0, 1, 1], [], []>} : vector<16x128xf32>, vector<128x128xf32>, vector<16x128xf32> -> vector<16x128xf32>
    %7 = arith.addf %3, %6 : vector<16x128xf32>
    %c0_6 = arith.constant 0 : index
    %c0_7 = arith.constant 0 : index
    %8 = vector.load %arg7[%c0_6, %c0_7] : memref<16x128xf32, #tpu.memory_space<vmem>>, vector<16x128xf32>
    tpu.vector_store %arg7[%c0_6, %c0_7], %7 {strides = array<i32>} : memref<16x128xf32, #tpu.memory_space<vmem>>, vector<16x128xf32>,
    %c0_i32_8 = arith.constant 0 : i32
    %9 = arith.cmpi eq, %arg2, %c0_i32_8 : i32
    %10 = arith.extui %9 : i1 to i32
    %c0_i32_9 = arith.constant 0 : i32
    %11 = arith.cmpi ne, %10, %c0_i32_9 : i32
    scf.if %11 {
      %c0_10 = arith.constant 0 : index
      %c0_11 = arith.constant 0 : index
      %12 = vector.load %arg7[%c0_10, %c0_11] : memref<16x128xf32, #tpu.memory_space<vmem>>, vector<16x128xf32>
      %c0_12 = arith.constant 0 : index
      %c0_13 = arith.constant 0 : index
      %13 = vector.load %arg5[%c0_12, %c0_13] : memref<1x128xf32, #tpu.memory_space<vmem>>, vector<1x128xf32>
      %14 = vector.broadcast %13 : vector<1x128xf32> to vector<16x128xf32>
      %15 = arith.addf %12, %14 : vector<16x128xf32>
      %c0_14 = arith.constant 0 : index
      %c0_15 = arith.constant 0 : index
      %16 = vector.load %arg6[%c0_14, %c0_15] : memref<16x128xf32, #tpu.memory_space<vmem>>, vector<16x128xf32>
      tpu.vector_store %arg6[%c0_14, %c0_15], %15 {strides = array<i32>} : memref<16x128xf32, #tpu.memory_space<vmem>>, vector<16x128xf32>,
    } else {
    }
    return
  }
  func.func @transform_0(%arg0: i32, %arg1: i32, %arg2: i32) -> (i32, i32) {
    %c0_i32 = arith.constant 0 : i32
    return %arg0, %arg2 : i32, i32
  }
  func.func @transform_1(%arg0: i32, %arg1: i32, %arg2: i32) -> (i32, i32) {
    %c0_i32 = arith.constant 0 : i32
    return %arg2, %arg1 : i32, i32
  }
  func.func @transform_2(%arg0: i32, %arg1: i32, %arg2: i32) -> (i32, i32) {
    %c0_i32 = arith.constant 0 : i32
    %c0_i32_0 = arith.constant 0 : i32
    return %c0_i32, %arg1 : i32, i32
  }
  func.func @transform_3(%arg0: i32, %arg1: i32, %arg2: i32) -> (i32, i32) {
    %c0_i32 = arith.constant 0 : i32
    return %arg0, %arg1 : i32, i32
  }
}

module attributes {stable_mosaic.version = 11 : i64} {
  func.func @_linear_kernel(%arg0: i32, %arg1: i32, %arg2: i32, %arg3: memref<16x128xf32, #tpu.memory_space<vmem>>, %arg4: memref<128x128xf32, #tpu.memory_space<vmem>>, %arg5: memref<1x128xf32, #tpu.memory_space<vmem>>, %arg6: memref<16x128xf32, #tpu.memory_space<vmem>>, %arg7: memref<16x128xf32, #tpu.memory_space<vmem>>) attributes {dimension_semantics = [#tpu.dimension_semantics<parallel>, #tpu.dimension_semantics<parallel>, #tpu.dimension_semantics<arbitrary>], iteration_bounds = array<i64: 1, 1, 1>, scalar_prefetch = 0 : i64, scratch_operands = 1 : i64, tpu.core_type = #tpu.core_type<tc>, window_params = [{transform_indices = @transform_0, window_bounds = array<i64: 16, 128>}, {transform_indices = @transform_1, window_bounds = array<i64: 128, 128>}, {transform_indices = @transform_2, window_bounds = array<i64: 1, 128>}, {transform_indices = @transform_3, window_bounds = array<i64: 16, 128>}]} {
    %c0_i32 = arith.constant 0 : i32
    %0 = arith.cmpi eq, %arg2, %c0_i32 : i32
    %1 = arith.extui %0 : i1 to i32
    %c0_i32_0 = arith.constant 0 : i32
    %2 = arith.cmpi ne, %1, %c0_i32_0 : i32
    scf.if %2 {
      %cst_10 = arith.constant 0.000000e+00 : f32
      %12 = vector.broadcast %cst_10 : f32 to vector<16x128xf32>
      %c0_11 = arith.constant 0 : index
      %c0_12 = arith.constant 0 : index
      %13 = vector.load %arg7[%c0_11, %c0_12] : memref<16x128xf32, #tpu.memory_space<vmem>>, vector<16x128xf32>
      tpu.vector_store %arg7[%c0_11, %c0_12], %12 {strides = array<i32>} : memref<16x128xf32, #tpu.memory_space<vmem>>, vector<16x128xf32>,
    } else {
    }
    %c0 = arith.constant 0 : index
    %c0_1 = arith.constant 0 : index
    %3 = vector.load %arg7[%c0, %c0_1] : memref<16x128xf32, #tpu.memory_space<vmem>>, vector<16x128xf32>
    %c0_2 = arith.constant 0 : index
    %c0_3 = arith.constant 0 : index
    %4 = vector.load %arg3[%c0_2, %c0_3] : memref<16x128xf32, #tpu.memory_space<vmem>>, vector<16x128xf32>
    %c0_4 = arith.constant 0 : index
    %c0_5 = arith.constant 0 : index
    %5 = vector.load %arg4[%c0_4, %c0_5] : memref<128x128xf32, #tpu.memory_space<vmem>>, vector<128x128xf32>
    %cst = arith.constant dense<0.000000e+00> : vector<16x128xf32>
    %6 = tpu.matmul %4, %5, %cst {dimension_numbers = #tpu.dot_dimension_numbers<[1], [0], [0], [1], [0, 0, 1, 1], [], []>} : vector<16x128xf32>, vector<128x128xf32>, vector<16x128xf32> -> vector<16x128xf32>
    %7 = arith.addf %3, %6 : vector<16x128xf32>
    %c0_6 = arith.constant 0 : index
    %c0_7 = arith.constant 0 : index
    %8 = vector.load %arg7[%c0_6, %c0_7] : memref<16x128xf32, #tpu.memory_space<vmem>>, vector<16x128xf32>
    tpu.vector_store %arg7[%c0_6, %c0_7], %7 {strides = array<i32>} : memref<16x128xf32, #tpu.memory_space<vmem>>, vector<16x128xf32>,
    %c0_i32_8 = arith.constant 0 : i32
    %9 = arith.cmpi eq, %arg2, %c0_i32_8 : i32
    %10 = arith.extui %9 : i1 to i32
    %c0_i32_9 = arith.constant 0 : i32
    %11 = arith.cmpi ne, %10, %c0_i32_9 : i32
    scf.if %11 {
      %c0_10 = arith.constant 0 : index
      %c0_11 = arith.constant 0 : index
      %12 = vector.load %arg7[%c0_10, %c0_11] : memref<16x128xf32, #tpu.memory_space<vmem>>, vector<16x128xf32>
      %c0_12 = arith.constant 0 : index
      %c0_13 = arith.constant 0 : index
      %13 = vector.load %arg5[%c0_12, %c0_13] : memref<1x128xf32, #tpu.memory_space<vmem>>, vector<1x128xf32>
      %14 = vector.broadcast %13 : vector<1x128xf32> to vector<16x128xf32>
      %15 = arith.addf %12, %14 : vector<16x128xf32>
      %c0_14 = arith.constant 0 : index
      %c0_15 = arith.constant 0 : index
      %16 = vector.load %arg6[%c0_14, %c0_15] : memref<16x128xf32, #tpu.memory_space<vmem>>, vector<16x128xf32>
      tpu.vector_store %arg6[%c0_14, %c0_15], %15 {strides = array<i32>} : memref<16x128xf32, #tpu.memory_space<vmem>>, vector<16x128xf32>,
    } else {
    }
    return
  }
  func.func @transform_0(%arg0: i32, %arg1: i32, %arg2: i32) -> (i32, i32) {
    %c0_i32 = arith.constant 0 : i32
    return %arg0, %arg2 : i32, i32
  }
  func.func @transform_1(%arg0: i32, %arg1: i32, %arg2: i32) -> (i32, i32) {
    %c0_i32 = arith.constant 0 : i32
    return %arg2, %arg1 : i32, i32
  }
  func.func @transform_2(%arg0: i32, %arg1: i32, %arg2: i32) -> (i32, i32) {
    %c0_i32 = arith.constant 0 : i32
    %c0_i32_0 = arith.constant 0 : i32
    return %c0_i32, %arg1 : i32, i32
  }
  func.func @transform_3(%arg0: i32, %arg1: i32, %arg2: i32) -> (i32, i32) {
    %c0_i32 = arith.constant 0 : i32
    return %arg0, %arg1 : i32, i32
  }
}

module attributes {stable_mosaic.version = 11 : i64} {
  func.func @_swiglu_kernel(%arg0: i32, %arg1: i32, %arg2: i32, %arg3: memref<16x128xf32, #tpu.memory_space<vmem>>, %arg4: memref<128x128xf32, #tpu.memory_space<vmem>>, %arg5: memref<1x128xf32, #tpu.memory_space<vmem>>, %arg6: memref<128x128xf32, #tpu.memory_space<vmem>>, %arg7: memref<1x128xf32, #tpu.memory_space<vmem>>, %arg8: memref<16x128xf32, #tpu.memory_space<vmem>>, %arg9: memref<16x128xf32, #tpu.memory_space<vmem>>, %arg10: memref<16x128xf32, #tpu.memory_space<vmem>>) attributes {dimension_semantics = [#tpu.dimension_semantics<parallel>, #tpu.dimension_semantics<parallel>, #tpu.dimension_semantics<arbitrary>], iteration_bounds = array<i64: 1, 1, 1>, scalar_prefetch = 0 : i64, scratch_operands = 2 : i64, tpu.core_type = #tpu.core_type<tc>, window_params = [{transform_indices = @transform_0, window_bounds = array<i64: 16, 128>}, {transform_indices = @transform_1, window_bounds = array<i64: 128, 128>}, {transform_indices = @transform_2, window_bounds = array<i64: 1, 128>}, {transform_indices = @transform_3, window_bounds = array<i64: 128, 128>}, {transform_indices = @transform_4, window_bounds = array<i64: 1, 128>}, {transform_indices = @transform_5, window_bounds = array<i64: 16, 128>}]} {
    %c0_i32 = arith.constant 0 : i32
    %0 = arith.cmpi eq, %arg2, %c0_i32 : i32
    %1 = arith.extui %0 : i1 to i32
    %c0_i32_0 = arith.constant 0 : i32
    %2 = arith.cmpi ne, %1, %c0_i32_0 : i32
    scf.if %2 {
      %cst_17 = arith.constant 0.000000e+00 : f32
      %17 = vector.broadcast %cst_17 : f32 to vector<16x128xf32>
      %c0_18 = arith.constant 0 : index
      %c0_19 = arith.constant 0 : index
      %18 = vector.load %arg9[%c0_18, %c0_19] : memref<16x128xf32, #tpu.memory_space<vmem>>, vector<16x128xf32>
      tpu.vector_store %arg9[%c0_18, %c0_19], %17 {strides = array<i32>} : memref<16x128xf32, #tpu.memory_space<vmem>>, vector<16x128xf32>,
      %cst_20 = arith.constant 0.000000e+00 : f32
      %19 = vector.broadcast %cst_20 : f32 to vector<16x128xf32>
      %c0_21 = arith.constant 0 : index
      %c0_22 = arith.constant 0 : index
      %20 = vector.load %arg10[%c0_21, %c0_22] : memref<16x128xf32, #tpu.memory_space<vmem>>, vector<16x128xf32>
      tpu.vector_store %arg10[%c0_21, %c0_22], %19 {strides = array<i32>} : memref<16x128xf32, #tpu.memory_space<vmem>>, vector<16x128xf32>,
    } else {
    }
    %c0 = arith.constant 0 : index
    %c0_1 = arith.constant 0 : index
    %3 = vector.load %arg3[%c0, %c0_1] : memref<16x128xf32, #tpu.memory_space<vmem>>, vector<16x128xf32>
    %c0_2 = arith.constant 0 : index
    %c0_3 = arith.constant 0 : index
    %4 = vector.load %arg9[%c0_2, %c0_3] : memref<16x128xf32, #tpu.memory_space<vmem>>, vector<16x128xf32>
    %c0_4 = arith.constant 0 : index
    %c0_5 = arith.constant 0 : index
    %5 = vector.load %arg4[%c0_4, %c0_5] : memref<128x128xf32, #tpu.memory_space<vmem>>, vector<128x128xf32>
    %cst = arith.constant dense<0.000000e+00> : vector<16x128xf32>
    %6 = tpu.matmul %3, %5, %cst {dimension_numbers = #tpu.dot_dimension_numbers<[1], [0], [0], [1], [0, 0, 1, 1], [], []>} : vector<16x128xf32>, vector<128x128xf32>, vector<16x128xf32> -> vector<16x128xf32>
    %7 = arith.addf %4, %6 : vector<16x128xf32>
    %c0_6 = arith.constant 0 : index
    %c0_7 = arith.constant 0 : index
    %8 = vector.load %arg9[%c0_6, %c0_7] : memref<16x128xf32, #tpu.memory_space<vmem>>, vector<16x128xf32>
    tpu.vector_store %arg9[%c0_6, %c0_7], %7 {strides = array<i32>} : memref<16x128xf32, #tpu.memory_space<vmem>>, vector<16x128xf32>,
    %c0_8 = arith.constant 0 : index
    %c0_9 = arith.constant 0 : index
    %9 = vector.load %arg10[%c0_8, %c0_9] : memref<16x128xf32, #tpu.memory_space<vmem>>, vector<16x128xf32>
    %c0_10 = arith.constant 0 : index
    %c0_11 = arith.constant 0 : index
    %10 = vector.load %arg6[%c0_10, %c0_11] : memref<128x128xf32, #tpu.memory_space<vmem>>, vector<128x128xf32>
    %cst_12 = arith.constant dense<0.000000e+00> : vector<16x128xf32>
    %11 = tpu.matmul %3, %10, %cst_12 {dimension_numbers = #tpu.dot_dimension_numbers<[1], [0], [0], [1], [0, 0, 1, 1], [], []>} : vector<16x128xf32>, vector<128x128xf32>, vector<16x128xf32> -> vector<16x128xf32>
    %12 = arith.addf %9, %11 : vector<16x128xf32>
    %c0_13 = arith.constant 0 : index
    %c0_14 = arith.constant 0 : index
    %13 = vector.load %arg10[%c0_13, %c0_14] : memref<16x128xf32, #tpu.memory_space<vmem>>, vector<16x128xf32>
    tpu.vector_store %arg10[%c0_13, %c0_14], %12 {strides = array<i32>} : memref<16x128xf32, #tpu.memory_space<vmem>>, vector<16x128xf32>,
    %c0_i32_15 = arith.constant 0 : i32
    %14 = arith.cmpi eq, %arg2, %c0_i32_15 : i32
    %15 = arith.extui %14 : i1 to i32
    %c0_i32_16 = arith.constant 0 : i32
    %16 = arith.cmpi ne, %15, %c0_i32_16 : i32
    scf.if %16 {
      %c0_17 = arith.constant 0 : index
      %c0_18 = arith.constant 0 : index
      %17 = vector.load %arg9[%c0_17, %c0_18] : memref<16x128xf32, #tpu.memory_space<vmem>>, vector<16x128xf32>
      %c0_19 = arith.constant 0 : index
      %c0_20 = arith.constant 0 : index
      %18 = vector.load %arg5[%c0_19, %c0_20] : memref<1x128xf32, #tpu.memory_space<vmem>>, vector<1x128xf32>
      %19 = vector.broadcast %18 : vector<1x128xf32> to vector<16x128xf32>
      %20 = arith.addf %17, %19 : vector<16x128xf32>
      %c0_21 = arith.constant 0 : index
      %c0_22 = arith.constant 0 : index
      %21 = vector.load %arg10[%c0_21, %c0_22] : memref<16x128xf32, #tpu.memory_space<vmem>>, vector<16x128xf32>
      %c0_23 = arith.constant 0 : index
      %c0_24 = arith.constant 0 : index
      %22 = vector.load %arg7[%c0_23, %c0_24] : memref<1x128xf32, #tpu.memory_space<vmem>>, vector<1x128xf32>
      %23 = vector.broadcast %22 : vector<1x128xf32> to vector<16x128xf32>
      %24 = arith.addf %21, %23 : vector<16x128xf32>
      %cst_25 = arith.constant 0.000000e+00 : f32
      %25 = vector.broadcast %cst_25 : f32 to vector<16x128xf32>
      %26 = arith.subf %25, %20 : vector<16x128xf32>
      %27 = math.exp %26 : vector<16x128xf32>
      %cst_26 = arith.constant 1.000000e+00 : f32
      %28 = vector.broadcast %cst_26 : f32 to vector<16x128xf32>
      %29 = arith.addf %28, %27 : vector<16x128xf32>
      %30 = tpu.reciprocal %29 : vector<16x128xf32> -> vector<16x128xf32>
      %31 = arith.mulf %20, %30 : vector<16x128xf32>
      %cst_27 = arith.constant 0.000000e+00 : f32
      %32 = vector.broadcast %cst_27 : f32 to vector<16x128xf32>
      %33 = arith.subf %32, %24 : vector<16x128xf32>
      %34 = math.exp %33 : vector<16x128xf32>
      %cst_28 = arith.constant 1.000000e+00 : f32
      %35 = vector.broadcast %cst_28 : f32 to vector<16x128xf32>
      %36 = arith.addf %35, %34 : vector<16x128xf32>
      %37 = tpu.reciprocal %36 : vector<16x128xf32> -> vector<16x128xf32>
      %38 = arith.mulf %31, %37 : vector<16x128xf32>
      %c0_29 = arith.constant 0 : index
      %c0_30 = arith.constant 0 : index
      %39 = vector.load %arg8[%c0_29, %c0_30] : memref<16x128xf32, #tpu.memory_space<vmem>>, vector<16x128xf32>
      tpu.vector_store %arg8[%c0_29, %c0_30], %38 {strides = array<i32>} : memref<16x128xf32, #tpu.memory_space<vmem>>, vector<16x128xf32>,
    } else {
    }
    return
  }
  func.func @transform_0(%arg0: i32, %arg1: i32, %arg2: i32) -> (i32, i32) {
    %c0_i32 = arith.constant 0 : i32
    return %arg0, %arg2 : i32, i32
  }
  func.func @transform_1(%arg0: i32, %arg1: i32, %arg2: i32) -> (i32, i32) {
    %c0_i32 = arith.constant 0 : i32
    return %arg2, %arg1 : i32, i32
  }
  func.func @transform_2(%arg0: i32, %arg1: i32, %arg2: i32) -> (i32, i32) {
    %c0_i32 = arith.constant 0 : i32
    %c0_i32_0 = arith.constant 0 : i32
    return %c0_i32, %arg1 : i32, i32
  }
  func.func @transform_3(%arg0: i32, %arg1: i32, %arg2: i32) -> (i32, i32) {
    %c0_i32 = arith.constant 0 : i32
    return %arg2, %arg1 : i32, i32
  }
  func.func @transform_4(%arg0: i32, %arg1: i32, %arg2: i32) -> (i32, i32) {
    %c0_i32 = arith.constant 0 : i32
    %c0_i32_0 = arith.constant 0 : i32
    return %c0_i32, %arg1 : i32, i32
  }
  func.func @transform_5(%arg0: i32, %arg1: i32, %arg2: i32) -> (i32, i32) {
    %c0_i32 = arith.constant 0 : i32
    return %arg0, %arg1 : i32, i32
  }
}

</mosaic_0001>

<llo_original>
// kernel: mlp_forward.5
$region0: #{mlp_forward.5}
  #allocation0 [shape = 'u32[]', space=smem, size = 0x4, offset = 0x4, fixed_abs, tag = 'smem constant byte address 0x4 - core index']
  #allocation1 [shape = 'u32[144,128]{1,0:T(1,128)}', space=vmem, size = 0x12000, scoped, tag = 'internal scratch']
  #allocation2 [shape = 'f32[16,128]{1,0:T(8,128)}', space=vmem, size = 0x2000, scoped, tag = 'scratch operand']
  %s0 = inlined_call_operand.vmem [shape: f32[16,128], index: 0, kind: input, shape index: {}]
  %s1 = inlined_call_operand.hbm [shape: f32[128,128], index: 1, kind: input, shape index: {}]
  %s2 = inlined_call_operand.hbm [shape: f32[1,128], index: 2, kind: input, shape index: {}]
  %s3 = inlined_call_operand.vmem [shape: f32[16,128], index: 3, kind: output, shape index: {}]
  %s4 = sld [smem:[#allocation0]]
  $region38: #{mlp_forward.5} parent=0
    _
  %s6 = ssub.s32 1, %s4
  %s7 = scalar_select 0, %s6, %s4
  $region1: #{mlp_forward.5} parent=0
    #allocation3 [shape = 'u8[65536]{0}', space=vmem, size = 0x10000, scoped, tag = 'input window, operand 1, single buffered']
    #allocation4 [shape = 's32[1]{0}', space=sflag, size = 0x4, scoped, tag = 'scoped memory for mlp_forward.5']
    #allocation5 [shape = 'u8[512]{0}', space=vmem, size = 0x400, scoped, tag = 'input window, operand 2, single buffered']
    #allocation6 [shape = 's32[1]{0}', space=sflag, size = 0x4, scoped, tag = 'scoped memory for mlp_forward.5']
    %8 = vsyncpa [#allocation4], 0
    %9 = vsyncpa [#allocation6], 0
    // Predicated region
    $region2: #{mlp_forward.5} parent=1 // pred_check
      _
    $region3: #{mlp_forward.5} parent=1 // pred_check_branch
      %11 = sbr.rel (0) target = $region5
    $region4: #{mlp_forward.5} parent=1 // pred_region
      _
    $region5: #{mlp_forward.5} parent=1 // pred_fallthru
      _
    // Predicated region
    $region6: #{mlp_forward.5} parent=1 // pred_check
      _
    $region7: #{mlp_forward.5} parent=1 // pred_check_branch
      %13 = sbr.rel (0) target = $region9
    $region8: #{mlp_forward.5} parent=1 // pred_region
      %s15 = ssub.s32 2048, 2048
      %16 = vsyncadd [#allocation4], %s15
      %s17 = sshll.u32 [#allocation3], 4
      %s18 = int_to_ptr.vmem [resolvable:$true] %s17
      %23 = dma.hbm_to_vmem [thread:$0]  %s1, 2048, %s18, [#allocation4], 128, 128, 8
    $region9: #{mlp_forward.5} parent=1 // pred_fallthru
      _
    // Predicated region
    $region10: #{mlp_forward.5} parent=1 // pred_check
      _
    $region11: #{mlp_forward.5} parent=1 // pred_check_branch
      %25 = sbr.rel (0) target = $region13
    $region12: #{mlp_forward.5} parent=1 // pred_region
      %s27 = ssub.s32 16, 16
      %28 = vsyncadd [#allocation6], %s27
      %s30 = sshll.u32 [#allocation5], 4
      %s31 = int_to_ptr.vmem [resolvable:$true] %s30
      %33 = dma.hbm_to_vmem [thread:$0]  %s2, 16, %s31, [#allocation6]
    $region13: #{mlp_forward.5} parent=1 // pred_fallthru
      _
    // Predicated region
    $region14: #{mlp_forward.5} parent=1 // pred_check
      _
    $region15: #{mlp_forward.5} parent=1 // pred_check_branch
      %35 = sbr.rel (0) target = $region17
    $region16: #{mlp_forward.5} parent=1 // pred_region
      %36 = dma.done [#allocation4], 2048
    $region17: #{mlp_forward.5} parent=1 // pred_fallthru
      _
    // Predicated region
    $region18: #{mlp_forward.5} parent=1 // pred_check
      _
    $region19: #{mlp_forward.5} parent=1 // pred_check_branch
      %38 = sbr.rel (0) target = $region21
    $region20: #{mlp_forward.5} parent=1 // pred_region
      %39 = dma.done [#allocation6], 16
    $region21: #{mlp_forward.5} parent=1 // pred_fallthru
      _
    %p40 = scmp.eq.s32.totalorder 0, 0
    // Predicated region
    $region22: #{mlp_forward.5} parent=1 // pred_check
      %p41 = pneg %p40
    $region23: #{mlp_forward.5} parent=1 // pred_check_branch
      %43 = sbr.rel (%p41) target = $region25
    $region24: #{mlp_forward.5} parent=1 // pred_region
      %44 = vst [vmem:[#allocation2] sm:$0xff] 0.0
      %45 = vst [vmem:[#allocation2 + $0x8] sm:$0xff] 0.0
    $region25: #{mlp_forward.5} parent=1 // pred_fallthru
      _
    %v46 = vld [vmem:[#allocation2] sm:$0xff]
    %v47 = vld [vmem:[#allocation2 + $0x8] sm:$0xff]
    %v48 = vld [vmem:[%s0] sm:$0xff]
    %v49 = vld [vmem:[%s0 + $0x8] sm:$0xff]
    %v50 = vld [vmem:[#allocation3] sm:$0xff]
    %v51 = vld [vmem:[#allocation3 + $0x8] sm:$0xff]
    %v52 = vld [vmem:[#allocation3 + $0x10] sm:$0xff]
    %v53 = vld [vmem:[#allocation3 + $0x18] sm:$0xff]
    %v54 = vld [vmem:[#allocation3 + $0x20] sm:$0xff]
    %v55 = vld [vmem:[#allocation3 + $0x28] sm:$0xff]
    %v56 = vld [vmem:[#allocation3 + $0x30] sm:$0xff]
    %v57 = vld [vmem:[#allocation3 + $0x38] sm:$0xff]
    %v58 = vld [vmem:[#allocation3 + $0x40] sm:$0xff]
    %v59 = vld [vmem:[#allocation3 + $0x48] sm:$0xff]
    %v60 = vld [vmem:[#allocation3 + $0x50] sm:$0xff]
    %v61 = vld [vmem:[#allocation3 + $0x58] sm:$0xff]
    %v62 = vld [vmem:[#allocation3 + $0x60] sm:$0xff]
    %v63 = vld [vmem:[#allocation3 + $0x68] sm:$0xff]
    %v64 = vld [vmem:[#allocation3 + $0x70] sm:$0xff]
    %v65 = vld [vmem:[#allocation3 + $0x78] sm:$0xff]
    %66 = vmatprep.subr.mxu0 0.0
    %67 = vmatpush1.msra.mxu0 %v50
    %68 = vmatprep.subr.mxu0 0.0
    %69 = vmatpush1.msra.mxu0 %v51
    %70 = vmatprep.subr.mxu0 0.0
    %71 = vmatpush1.msra.mxu0 %v52
    %72 = vmatprep.subr.mxu0 0.0
    %73 = vmatpush1.msra.mxu0 %v53
    %74 = vmatprep.subr.mxu0 0.0
    %75 = vmatpush1.msra.mxu0 %v54
    %76 = vmatprep.subr.mxu0 0.0
    %77 = vmatpush1.msra.mxu0 %v55
    %78 = vmatprep.subr.mxu0 0.0
    %79 = vmatpush1.msra.mxu0 %v56
    %80 = vmatprep.subr.mxu0 0.0
    %81 = vmatpush1.msra.mxu0 %v57
    %82 = vmatprep.subr.mxu0 0.0
    %83 = vmatpush1.msra.mxu0 %v58
    %84 = vmatprep.subr.mxu0 0.0
    %85 = vmatpush1.msra.mxu0 %v59
    %86 = vmatprep.subr.mxu0 0.0
    %87 = vmatpush1.msra.mxu0 %v60
    %88 = vmatprep.subr.mxu0 0.0
    %89 = vmatpush1.msra.mxu0 %v61
    %90 = vmatprep.subr.mxu0 0.0
    %91 = vmatpush1.msra.mxu0 %v62
    %92 = vmatprep.subr.mxu0 0.0
    %93 = vmatpush1.msra.mxu0 %v63
    %94 = vmatprep.subr.mxu0 0.0
    %95 = vmatpush1.msra.mxu0 %v64
    %96 = vmatprep.subr.mxu0 0.0
    %97 = vmatpush1.msra.mxu0 %v65
    %98 = vmatprep.subr.mxu0 0.0
    %99 = vmatpush1.msra.mxu0 0.0
    %100 = vmatprep.subr.mxu0 0.0
    %101 = vmatpush1.msra.mxu0 0.0
    %102 = vmatprep.subr.mxu0 0.0
    %103 = vmatpush1.msra.mxu0 0.0
    %104 = vmatprep.subr.mxu0 0.0
    %105 = vmatpush1.msra.mxu0 0.0
    %106 = vmatprep.subr.mxu0 0.0
    %107 = vmatpush1.msra.mxu0 0.0
    %108 = vmatprep.subr.mxu0 0.0
    %109 = vmatpush1.msra.mxu0 0.0
    %110 = vmatprep.subr.mxu0 0.0
    %111 = vmatpush1.msra.mxu0 0.0
    %112 = vmatprep.subr.mxu0 0.0
    %113 = vmatpush1.msra.mxu0 0.0
    %114 = vmatprep.subr.mxu0 0.0
    %115 = vmatpush1.msra.mxu0 0.0
    %116 = vmatprep.subr.mxu0 0.0
    %117 = vmatpush1.msra.mxu0 0.0
    %118 = vmatprep.subr.mxu0 0.0
    %119 = vmatpush1.msra.mxu0 0.0
    %120 = vmatprep.subr.mxu0 0.0
    %121 = vmatpush1.msra.mxu0 0.0
    %122 = vmatprep.subr.mxu0 0.0
    %123 = vmatpush1.msra.mxu0 0.0
    %124 = vmatprep.subr.mxu0 0.0
    %125 = vmatpush1.msra.mxu0 0.0
    %126 = vmatprep.subr.mxu0 0.0
    %127 = vmatpush1.msra.mxu0 0.0
    %128 = vmatprep.subr.mxu0 0.0
    %129 = vmatpush1.msra.mxu0 0.0
    %130 = vmatprep.mubr.f32.mxu0 0.0
    %131 = vmatmul.mubr.f32.gmra.mrb[0].mxu0 %v48
    %v132 = vpop.f32.mrb[0].mxu0
    %v133 = vadd.f32 0.0, %v132
    %v134 = vpop.f32.mrb[0].mxu0
    %135 = vmatprep.mubr.f32.mxu0 0.0
    %136 = vmatmul.mubr.f32.gmra.mrb[0].mxu0 %v49
    %v137 = vpop.f32.mrb[0].mxu0
    %v138 = vadd.f32 0.0, %v137
    %v139 = vpop.f32.mrb[0].mxu0
    %140 = vdwg.mxu0
    %v141 = vadd.f32 %v46, %v133
    %v142 = vadd.f32 %v47, %v138
    %143 = vst [vmem:[#allocation2] sm:$0xff] %v141
    %144 = vst [vmem:[#allocation2 + $0x8] sm:$0xff] %v142
    // Predicated region
    $region26: #{mlp_forward.5} parent=1 // pred_check
      %p145 = pneg %p40
    $region27: #{mlp_forward.5} parent=1 // pred_check_branch
      %147 = sbr.rel (%p145) target = $region29
    $region28: #{mlp_forward.5} parent=1 // pred_region
      %v148 = vld [vmem:[#allocation2] sm:$0xff]
      %v149 = vld [vmem:[#allocation2 + $0x8] sm:$0xff]
      %v150 = vld [vmem:[#allocation5] sm:$0x1]
      %v152 = vlaneseq
      %v153 = vshrl.u32 %v152, 7
      %v154 = vsub.s32 0, %v153
      %v155 = vrot.slane %v150, %v154
      %v157 = vadd.f32 %v148, %v155
      %v158 = vadd.f32 %v149, %v155
      %159 = vst [vmem:[%s3] sm:$0xff] %v157
      %160 = vst [vmem:[%s3 + $0x8] sm:$0xff] %v158
    $region29: #{mlp_forward.5} parent=1 // pred_fallthru
      _
    // Predicated region
    $region30: #{mlp_forward.5} parent=1 // pred_check
      _
    $region31: #{mlp_forward.5} parent=1 // pred_check_branch
      %162 = sbr.rel (0) target = $region33
    $region32: #{mlp_forward.5} parent=1 // pred_region
      _
    $region33: #{mlp_forward.5} parent=1 // pred_fallthru
      _
    // Predicated region
    $region34: #{mlp_forward.5} parent=1 // pred_check
      _
    $region35: #{mlp_forward.5} parent=1 // pred_check_branch
      %164 = sbr.rel (0) target = $region37
    $region36: #{mlp_forward.5} parent=1 // pred_region
      _
    $region37: #{mlp_forward.5} parent=1 // pred_fallthru
      _
    %165 = vsyncpa [#allocation4], 1
    %166 = vsyncpa [#allocation6], 1

// kernel: mlp_forward.7
$region0: #{mlp_forward.7}
  #allocation0 [shape = 'u32[]', space=smem, size = 0x4, offset = 0x4, fixed_abs, tag = 'smem constant byte address 0x4 - core index']
  #allocation1 [shape = 'u32[144,128]{1,0:T(1,128)}', space=vmem, size = 0x12000, scoped, tag = 'internal scratch']
  #allocation2 [shape = 'f32[16,128]{1,0:T(8,128)}', space=vmem, size = 0x2000, scoped, tag = 'scratch operand']
  %s0 = inlined_call_operand.vmem [shape: f32[16,128], index: 0, kind: input, shape index: {}]
  %s1 = inlined_call_operand.vmem [shape: f32[128,128], index: 1, kind: input, shape index: {}]
  %s2 = inlined_call_operand.vmem [shape: f32[1,128], index: 2, kind: input, shape index: {}]
  %s3 = inlined_call_operand.vmem [shape: f32[16,128], index: 3, kind: output, shape index: {}]
  %s4 = sld [smem:[#allocation0]]
  $region30: #{mlp_forward.7} parent=0
    _
  %s6 = ssub.s32 1, %s4
  %s7 = scalar_select 0, %s6, %s4
  // Predicated region
  $region2: #{mlp_forward.7} parent=0 // pred_check
    _
  $region3: #{mlp_forward.7} parent=0 // pred_check_branch
    %9 = sbr.rel (0) target = $region5
  $region4: #{mlp_forward.7} parent=0 // pred_region
    _
  $region5: #{mlp_forward.7} parent=0 // pred_fallthru
    _
  // Predicated region
  $region6: #{mlp_forward.7} parent=0 // pred_check
    _
  $region7: #{mlp_forward.7} parent=0 // pred_check_branch
    %11 = sbr.rel (0) target = $region9
  $region8: #{mlp_forward.7} parent=0 // pred_region
    _
  $region9: #{mlp_forward.7} parent=0 // pred_fallthru
    _
  // Predicated region
  $region10: #{mlp_forward.7} parent=0 // pred_check
    _
  $region11: #{mlp_forward.7} parent=0 // pred_check_branch
    %13 = sbr.rel (0) target = $region13
  $region12: #{mlp_forward.7} parent=0 // pred_region
    _
  $region13: #{mlp_forward.7} parent=0 // pred_fallthru
    _
  %p14 = scmp.eq.s32.totalorder 0, 0
  // Predicated region
  $region14: #{mlp_forward.7} parent=0 // pred_check
    %p15 = pneg %p14
  $region15: #{mlp_forward.7} parent=0 // pred_check_branch
    %17 = sbr.rel (%p15) target = $region17
  $region16: #{mlp_forward.7} parent=0 // pred_region
    %18 = vst [vmem:[#allocation2] sm:$0xff] 0.0
    %19 = vst [vmem:[#allocation2 + $0x8] sm:$0xff] 0.0
  $region17: #{mlp_forward.7} parent=0 // pred_fallthru
    _
  %v20 = vld [vmem:[#allocation2] sm:$0xff]
  %v21 = vld [vmem:[#allocation2 + $0x8] sm:$0xff]
  %v22 = vld [vmem:[%s0] sm:$0xff]
  %v23 = vld [vmem:[%s0 + $0x8] sm:$0xff]
  %v24 = vld [vmem:[%s1] sm:$0xff]
  %v25 = vld [vmem:[%s1 + $0x8] sm:$0xff]
  %v26 = vld [vmem:[%s1 + $0x10] sm:$0xff]
  %v27 = vld [vmem:[%s1 + $0x18] sm:$0xff]
  %v28 = vld [vmem:[%s1 + $0x20] sm:$0xff]
  %v29 = vld [vmem:[%s1 + $0x28] sm:$0xff]
  %v30 = vld [vmem:[%s1 + $0x30] sm:$0xff]
  %v31 = vld [vmem:[%s1 + $0x38] sm:$0xff]
  %v32 = vld [vmem:[%s1 + $0x40] sm:$0xff]
  %v33 = vld [vmem:[%s1 + $0x48] sm:$0xff]
  %v34 = vld [vmem:[%s1 + $0x50] sm:$0xff]
  %v35 = vld [vmem:[%s1 + $0x58] sm:$0xff]
  %v36 = vld [vmem:[%s1 + $0x60] sm:$0xff]
  %v37 = vld [vmem:[%s1 + $0x68] sm:$0xff]
  %v38 = vld [vmem:[%s1 + $0x70] sm:$0xff]
  %v39 = vld [vmem:[%s1 + $0x78] sm:$0xff]
  %40 = vmatprep.subr.mxu0 0.0
  %41 = vmatpush1.msra.mxu0 %v24
  %42 = vmatprep.subr.mxu0 0.0
  %43 = vmatpush1.msra.mxu0 %v25
  %44 = vmatprep.subr.mxu0 0.0
  %45 = vmatpush1.msra.mxu0 %v26
  %46 = vmatprep.subr.mxu0 0.0
  %47 = vmatpush1.msra.mxu0 %v27
  %48 = vmatprep.subr.mxu0 0.0
  %49 = vmatpush1.msra.mxu0 %v28
  %50 = vmatprep.subr.mxu0 0.0
  %51 = vmatpush1.msra.mxu0 %v29
  %52 = vmatprep.subr.mxu0 0.0
  %53 = vmatpush1.msra.mxu0 %v30
  %54 = vmatprep.subr.mxu0 0.0
  %55 = vmatpush1.msra.mxu0 %v31
  %56 = vmatprep.subr.mxu0 0.0
  %57 = vmatpush1.msra.mxu0 %v32
  %58 = vmatprep.subr.mxu0 0.0
  %59 = vmatpush1.msra.mxu0 %v33
  %60 = vmatprep.subr.mxu0 0.0
  %61 = vmatpush1.msra.mxu0 %v34
  %62 = vmatprep.subr.mxu0 0.0
  %63 = vmatpush1.msra.mxu0 %v35
  %64 = vmatprep.subr.mxu0 0.0
  %65 = vmatpush1.msra.mxu0 %v36
  %66 = vmatprep.subr.mxu0 0.0
  %67 = vmatpush1.msra.mxu0 %v37
  %68 = vmatprep.subr.mxu0 0.0
  %69 = vmatpush1.msra.mxu0 %v38
  %70 = vmatprep.subr.mxu0 0.0
  %71 = vmatpush1.msra.mxu0 %v39
  %72 = vmatprep.subr.mxu0 0.0
  %73 = vmatpush1.msra.mxu0 0.0
  %74 = vmatprep.subr.mxu0 0.0
  %75 = vmatpush1.msra.mxu0 0.0
  %76 = vmatprep.subr.mxu0 0.0
  %77 = vmatpush1.msra.mxu0 0.0
  %78 = vmatprep.subr.mxu0 0.0
  %79 = vmatpush1.msra.mxu0 0.0
  %80 = vmatprep.subr.mxu0 0.0
  %81 = vmatpush1.msra.mxu0 0.0
  %82 = vmatprep.subr.mxu0 0.0
  %83 = vmatpush1.msra.mxu0 0.0
  %84 = vmatprep.subr.mxu0 0.0
  %85 = vmatpush1.msra.mxu0 0.0
  %86 = vmatprep.subr.mxu0 0.0
  %87 = vmatpush1.msra.mxu0 0.0
  %88 = vmatprep.subr.mxu0 0.0
  %89 = vmatpush1.msra.mxu0 0.0
  %90 = vmatprep.subr.mxu0 0.0
  %91 = vmatpush1.msra.mxu0 0.0
  %92 = vmatprep.subr.mxu0 0.0
  %93 = vmatpush1.msra.mxu0 0.0
  %94 = vmatprep.subr.mxu0 0.0
  %95 = vmatpush1.msra.mxu0 0.0
  %96 = vmatprep.subr.mxu0 0.0
  %97 = vmatpush1.msra.mxu0 0.0
  %98 = vmatprep.subr.mxu0 0.0
  %99 = vmatpush1.msra.mxu0 0.0
  %100 = vmatprep.subr.mxu0 0.0
  %101 = vmatpush1.msra.mxu0 0.0
  %102 = vmatprep.subr.mxu0 0.0
  %103 = vmatpush1.msra.mxu0 0.0
  %104 = vmatprep.mubr.f32.mxu0 0.0
  %105 = vmatmul.mubr.f32.gmra.mrb[0].mxu0 %v22
  %v106 = vpop.f32.mrb[0].mxu0
  %v107 = vadd.f32 0.0, %v106
  %v108 = vpop.f32.mrb[0].mxu0
  %109 = vmatprep.mubr.f32.mxu0 0.0
  %110 = vmatmul.mubr.f32.gmra.mrb[0].mxu0 %v23
  %v111 = vpop.f32.mrb[0].mxu0
  %v112 = vadd.f32 0.0, %v111
  %v113 = vpop.f32.mrb[0].mxu0
  %114 = vdwg.mxu0
  %v115 = vadd.f32 %v20, %v107
  %v116 = vadd.f32 %v21, %v112
  %117 = vst [vmem:[#allocation2] sm:$0xff] %v115
  %118 = vst [vmem:[#allocation2 + $0x8] sm:$0xff] %v116
  // Predicated region
  $region18: #{mlp_forward.7} parent=0 // pred_check
    %p119 = pneg %p14
  $region19: #{mlp_forward.7} parent=0 // pred_check_branch
    %121 = sbr.rel (%p119) target = $region21
  $region20: #{mlp_forward.7} parent=0 // pred_region
    %v122 = vld [vmem:[#allocation2] sm:$0xff]
    %v123 = vld [vmem:[#allocation2 + $0x8] sm:$0xff]
    %v124 = vld [vmem:[%s2] sm:$0x1]
    %v126 = vlaneseq
    %v127 = vshrl.u32 %v126, 7
    %v128 = vsub.s32 0, %v127
    %v129 = vrot.slane %v124, %v128
    %v131 = vadd.f32 %v122, %v129
    %v132 = vadd.f32 %v123, %v129
    %133 = vst [vmem:[%s3] sm:$0xff] %v131
    %134 = vst [vmem:[%s3 + $0x8] sm:$0xff] %v132
  $region21: #{mlp_forward.7} parent=0 // pred_fallthru
    _
  // Predicated region
  $region22: #{mlp_forward.7} parent=0 // pred_check
    _
  $region23: #{mlp_forward.7} parent=0 // pred_check_branch
    %136 = sbr.rel (0) target = $region25
  $region24: #{mlp_forward.7} parent=0 // pred_region
    _
  $region25: #{mlp_forward.7} parent=0 // pred_fallthru
    _
  // Predicated region
  $region26: #{mlp_forward.7} parent=0 // pred_check
    _
  $region27: #{mlp_forward.7} parent=0 // pred_check_branch
    %138 = sbr.rel (0) target = $region29
  $region28: #{mlp_forward.7} parent=0 // pred_region
    _
  $region29: #{mlp_forward.7} parent=0 // pred_fallthru
    _

// kernel: mlp_forward.6
$region0: #{mlp_forward.6}
  #allocation0 [shape = 'u32[]', space=smem, size = 0x4, offset = 0x4, fixed_abs, tag = 'smem constant byte address 0x4 - core index']
  #allocation1 [shape = 'u32[144,128]{1,0:T(1,128)}', space=vmem, size = 0x12000, scoped, tag = 'internal scratch']
  #allocation2 [shape = 'f32[16,128]{1,0:T(8,128)}', space=vmem, size = 0x2000, scoped, tag = 'scratch operand']
  #allocation3 [shape = 'f32[16,128]{1,0:T(8,128)}', space=vmem, size = 0x2000, scoped, tag = 'scratch operand']
  %s0 = inlined_call_operand.vmem [shape: f32[16,128], index: 0, kind: input, shape index: {}]
  %s1 = inlined_call_operand.vmem [shape: f32[128,128], index: 1, kind: input, shape index: {}]
  %s2 = inlined_call_operand.vmem [shape: f32[1,128], index: 2, kind: input, shape index: {}]
  %s3 = inlined_call_operand.hbm [shape: f32[128,128], index: 3, kind: input, shape index: {}]
  %s4 = inlined_call_operand.vmem [shape: f32[1,128], index: 4, kind: input, shape index: {}]
  %s5 = inlined_call_operand.vmem [shape: f32[16,128], index: 5, kind: output, shape index: {}]
  %s6 = sld [smem:[#allocation0]]
  $region42: #{mlp_forward.6} parent=0
    _
  %s8 = ssub.s32 1, %s6
  %s9 = scalar_select 0, %s8, %s6
  $region1: #{mlp_forward.6} parent=0
    #allocation4 [shape = 'u8[65536]{0}', space=vmem, size = 0x10000, scoped, tag = 'input window, operand 3, single buffered']
    #allocation5 [shape = 's32[1]{0}', space=sflag, size = 0x4, scoped, tag = 'scoped memory for mlp_forward.6']
    %10 = vsyncpa [#allocation5], 0
    // Predicated region
    $region2: #{mlp_forward.6} parent=1 // pred_check
      _
    $region3: #{mlp_forward.6} parent=1 // pred_check_branch
      %12 = sbr.rel (0) target = $region5
    $region4: #{mlp_forward.6} parent=1 // pred_region
      _
    $region5: #{mlp_forward.6} parent=1 // pred_fallthru
      _
    // Predicated region
    $region6: #{mlp_forward.6} parent=1 // pred_check
      _
    $region7: #{mlp_forward.6} parent=1 // pred_check_branch
      %14 = sbr.rel (0) target = $region9
    $region8: #{mlp_forward.6} parent=1 // pred_region
      _
    $region9: #{mlp_forward.6} parent=1 // pred_fallthru
      _
    // Predicated region
    $region10: #{mlp_forward.6} parent=1 // pred_check
      _
    $region11: #{mlp_forward.6} parent=1 // pred_check_branch
      %16 = sbr.rel (0) target = $region13
    $region12: #{mlp_forward.6} parent=1 // pred_region
      _
    $region13: #{mlp_forward.6} parent=1 // pred_fallthru
      _
    // Predicated region
    $region14: #{mlp_forward.6} parent=1 // pred_check
      _
    $region15: #{mlp_forward.6} parent=1 // pred_check_branch
      %18 = sbr.rel (0) target = $region17
    $region16: #{mlp_forward.6} parent=1 // pred_region
      %s20 = ssub.s32 2048, 2048
      %21 = vsyncadd [#allocation5], %s20
      %s22 = sshll.u32 [#allocation4], 4
      %s23 = int_to_ptr.vmem [resolvable:$true] %s22
      %28 = dma.hbm_to_vmem [thread:$0]  %s3, 2048, %s23, [#allocation5], 128, 128, 8
    $region17: #{mlp_forward.6} parent=1 // pred_fallthru
      _
    // Predicated region
    $region18: #{mlp_forward.6} parent=1 // pred_check
      _
    $region19: #{mlp_forward.6} parent=1 // pred_check_branch
      %30 = sbr.rel (0) target = $region21
    $region20: #{mlp_forward.6} parent=1 // pred_region
      _
    $region21: #{mlp_forward.6} parent=1 // pred_fallthru
      _
    // Predicated region
    $region22: #{mlp_forward.6} parent=1 // pred_check
      _
    $region23: #{mlp_forward.6} parent=1 // pred_check_branch
      %32 = sbr.rel (0) target = $region25
    $region24: #{mlp_forward.6} parent=1 // pred_region
      %33 = dma.done [#allocation5], 2048
    $region25: #{mlp_forward.6} parent=1 // pred_fallthru
      _
    %p34 = scmp.eq.s32.totalorder 0, 0
    // Predicated region
    $region26: #{mlp_forward.6} parent=1 // pred_check
      %p35 = pneg %p34
    $region27: #{mlp_forward.6} parent=1 // pred_check_branch
      %37 = sbr.rel (%p35) target = $region29
    $region28: #{mlp_forward.6} parent=1 // pred_region
      %38 = vst [vmem:[#allocation2] sm:$0xff] 0.0
      %39 = vst [vmem:[#allocation2 + $0x8] sm:$0xff] 0.0
      %40 = vst [vmem:[#allocation3] sm:$0xff] 0.0
      %41 = vst [vmem:[#allocation3 + $0x8] sm:$0xff] 0.0
    $region29: #{mlp_forward.6} parent=1 // pred_fallthru
      _
    %v42 = vld [vmem:[%s0] sm:$0xff]
    %v43 = vld [vmem:[%s0 + $0x8] sm:$0xff]
    %v44 = vld [vmem:[#allocation2] sm:$0xff]
    %v45 = vld [vmem:[#allocation2 + $0x8] sm:$0xff]
    %v46 = vld [vmem:[%s1] sm:$0xff]
    %v47 = vld [vmem:[%s1 + $0x8] sm:$0xff]
    %v48 = vld [vmem:[%s1 + $0x10] sm:$0xff]
    %v49 = vld [vmem:[%s1 + $0x18] sm:$0xff]
    %v50 = vld [vmem:[%s1 + $0x20] sm:$0xff]
    %v51 = vld [vmem:[%s1 + $0x28] sm:$0xff]
    %v52 = vld [vmem:[%s1 + $0x30] sm:$0xff]
    %v53 = vld [vmem:[%s1 + $0x38] sm:$0xff]
    %v54 = vld [vmem:[%s1 + $0x40] sm:$0xff]
    %v55 = vld [vmem:[%s1 + $0x48] sm:$0xff]
    %v56 = vld [vmem:[%s1 + $0x50] sm:$0xff]
    %v57 = vld [vmem:[%s1 + $0x58] sm:$0xff]
    %v58 = vld [vmem:[%s1 + $0x60] sm:$0xff]
    %v59 = vld [vmem:[%s1 + $0x68] sm:$0xff]
    %v60 = vld [vmem:[%s1 + $0x70] sm:$0xff]
    %v61 = vld [vmem:[%s1 + $0x78] sm:$0xff]
    %62 = vmatprep.subr.mxu0 0.0
    %63 = vmatpush1.msra.mxu0 %v46
    %64 = vmatprep.subr.mxu0 0.0
    %65 = vmatpush1.msra.mxu0 %v47
    %66 = vmatprep.subr.mxu0 0.0
    %67 = vmatpush1.msra.mxu0 %v48
    %68 = vmatprep.subr.mxu0 0.0
    %69 = vmatpush1.msra.mxu0 %v49
    %70 = vmatprep.subr.mxu0 0.0
    %71 = vmatpush1.msra.mxu0 %v50
    %72 = vmatprep.subr.mxu0 0.0
    %73 = vmatpush1.msra.mxu0 %v51
    %74 = vmatprep.subr.mxu0 0.0
    %75 = vmatpush1.msra.mxu0 %v52
    %76 = vmatprep.subr.mxu0 0.0
    %77 = vmatpush1.msra.mxu0 %v53
    %78 = vmatprep.subr.mxu0 0.0
    %79 = vmatpush1.msra.mxu0 %v54
    %80 = vmatprep.subr.mxu0 0.0
    %81 = vmatpush1.msra.mxu0 %v55
    %82 = vmatprep.subr.mxu0 0.0
    %83 = vmatpush1.msra.mxu0 %v56
    %84 = vmatprep.subr.mxu0 0.0
    %85 = vmatpush1.msra.mxu0 %v57
    %86 = vmatprep.subr.mxu0 0.0
    %87 = vmatpush1.msra.mxu0 %v58
    %88 = vmatprep.subr.mxu0 0.0
    %89 = vmatpush1.msra.mxu0 %v59
    %90 = vmatprep.subr.mxu0 0.0
    %91 = vmatpush1.msra.mxu0 %v60
    %92 = vmatprep.subr.mxu0 0.0
    %93 = vmatpush1.msra.mxu0 %v61
    %94 = vmatprep.subr.mxu0 0.0
    %95 = vmatpush1.msra.mxu0 0.0
    %96 = vmatprep.subr.mxu0 0.0
    %97 = vmatpush1.msra.mxu0 0.0
    %98 = vmatprep.subr.mxu0 0.0
    %99 = vmatpush1.msra.mxu0 0.0
    %100 = vmatprep.subr.mxu0 0.0
    %101 = vmatpush1.msra.mxu0 0.0
    %102 = vmatprep.subr.mxu0 0.0
    %103 = vmatpush1.msra.mxu0 0.0
    %104 = vmatprep.subr.mxu0 0.0
    %105 = vmatpush1.msra.mxu0 0.0
    %106 = vmatprep.subr.mxu0 0.0
    %107 = vmatpush1.msra.mxu0 0.0
    %108 = vmatprep.subr.mxu0 0.0
    %109 = vmatpush1.msra.mxu0 0.0
    %110 = vmatprep.subr.mxu0 0.0
    %111 = vmatpush1.msra.mxu0 0.0
    %112 = vmatprep.subr.mxu0 0.0
    %113 = vmatpush1.msra.mxu0 0.0
    %114 = vmatprep.subr.mxu0 0.0
    %115 = vmatpush1.msra.mxu0 0.0
    %116 = vmatprep.subr.mxu0 0.0
    %117 = vmatpush1.msra.mxu0 0.0
    %118 = vmatprep.subr.mxu0 0.0
    %119 = vmatpush1.msra.mxu0 0.0
    %120 = vmatprep.subr.mxu0 0.0
    %121 = vmatpush1.msra.mxu0 0.0
    %122 = vmatprep.subr.mxu0 0.0
    %123 = vmatpush1.msra.mxu0 0.0
    %124 = vmatprep.subr.mxu0 0.0
    %125 = vmatpush1.msra.mxu0 0.0
    %126 = vmatprep.mubr.f32.mxu0 0.0
    %127 = vmatmul.mubr.f32.gmra.mrb[0].mxu0 %v42
    %v128 = vpop.f32.mrb[0].mxu0
    %v129 = vadd.f32 0.0, %v128
    %v130 = vpop.f32.mrb[0].mxu0
    %131 = vmatprep.mubr.f32.mxu0 0.0
    %132 = vmatmul.mubr.f32.gmra.mrb[0].mxu0 %v43
    %v133 = vpop.f32.mrb[0].mxu0
    %v134 = vadd.f32 0.0, %v133
    %v135 = vpop.f32.mrb[0].mxu0
    %136 = vdwg.mxu0
    %v137 = vadd.f32 %v44, %v129
    %v138 = vadd.f32 %v45, %v134
    %139 = vst [vmem:[#allocation2] sm:$0xff] %v137
    %140 = vst [vmem:[#allocation2 + $0x8] sm:$0xff] %v138
    %v141 = vld [vmem:[#allocation3] sm:$0xff]
    %v142 = vld [vmem:[#allocation3 + $0x8] sm:$0xff]
    %v143 = vld [vmem:[#allocation4] sm:$0xff]
    %v144 = vld [vmem:[#allocation4 + $0x8] sm:$0xff]
    %v145 = vld [vmem:[#allocation4 + $0x10] sm:$0xff]
    %v146 = vld [vmem:[#allocation4 + $0x18] sm:$0xff]
    %v147 = vld [vmem:[#allocation4 + $0x20] sm:$0xff]
    %v148 = vld [vmem:[#allocation4 + $0x28] sm:$0xff]
    %v149 = vld [vmem:[#allocation4 + $0x30] sm:$0xff]
    %v150 = vld [vmem:[#allocation4 + $0x38] sm:$0xff]
    %v151 = vld [vmem:[#allocation4 + $0x40] sm:$0xff]
    %v152 = vld [vmem:[#allocation4 + $0x48] sm:$0xff]
    %v153 = vld [vmem:[#allocation4 + $0x50] sm:$0xff]
    %v154 = vld [vmem:[#allocation4 + $0x58] sm:$0xff]
    %v155 = vld [vmem:[#allocation4 + $0x60] sm:$0xff]
    %v156 = vld [vmem:[#allocation4 + $0x68] sm:$0xff]
    %v157 = vld [vmem:[#allocation4 + $0x70] sm:$0xff]
    %v158 = vld [vmem:[#allocation4 + $0x78] sm:$0xff]
    %159 = vmatprep.subr.mxu0 0.0
    %160 = vmatpush1.msra.mxu0 %v143
    %161 = vmatprep.subr.mxu0 0.0
    %162 = vmatpush1.msra.mxu0 %v144
    %163 = vmatprep.subr.mxu0 0.0
    %164 = vmatpush1.msra.mxu0 %v145
    %165 = vmatprep.subr.mxu0 0.0
    %166 = vmatpush1.msra.mxu0 %v146
    %167 = vmatprep.subr.mxu0 0.0
    %168 = vmatpush1.msra.mxu0 %v147
    %169 = vmatprep.subr.mxu0 0.0
    %170 = vmatpush1.msra.mxu0 %v148
    %171 = vmatprep.subr.mxu0 0.0
    %172 = vmatpush1.msra.mxu0 %v149
    %173 = vmatprep.subr.mxu0 0.0
    %174 = vmatpush1.msra.mxu0 %v150
    %175 = vmatprep.subr.mxu0 0.0
    %176 = vmatpush1.msra.mxu0 %v151
    %177 = vmatprep.subr.mxu0 0.0
    %178 = vmatpush1.msra.mxu0 %v152
    %179 = vmatprep.subr.mxu0 0.0
    %180 = vmatpush1.msra.mxu0 %v153
    %181 = vmatprep.subr.mxu0 0.0
    %182 = vmatpush1.msra.mxu0 %v154
    %183 = vmatprep.subr.mxu0 0.0
    %184 = vmatpush1.msra.mxu0 %v155
    %185 = vmatprep.subr.mxu0 0.0
    %186 = vmatpush1.msra.mxu0 %v156
    %187 = vmatprep.subr.mxu0 0.0
    %188 = vmatpush1.msra.mxu0 %v157
    %189 = vmatprep.subr.mxu0 0.0
    %190 = vmatpush1.msra.mxu0 %v158
    %191 = vmatprep.subr.mxu0 0.0
    %192 = vmatpush1.msra.mxu0 0.0
    %193 = vmatprep.subr.mxu0 0.0
    %194 = vmatpush1.msra.mxu0 0.0
    %195 = vmatprep.subr.mxu0 0.0
    %196 = vmatpush1.msra.mxu0 0.0
    %197 = vmatprep.subr.mxu0 0.0
    %198 = vmatpush1.msra.mxu0 0.0
    %199 = vmatprep.subr.mxu0 0.0
    %200 = vmatpush1.msra.mxu0 0.0
    %201 = vmatprep.subr.mxu0 0.0
    %202 = vmatpush1.msra.mxu0 0.0
    %203 = vmatprep.subr.mxu0 0.0
    %204 = vmatpush1.msra.mxu0 0.0
    %205 = vmatprep.subr.mxu0 0.0
    %206 = vmatpush1.msra.mxu0 0.0
    %207 = vmatprep.subr.mxu0 0.0
    %208 = vmatpush1.msra.mxu0 0.0
    %209 = vmatprep.subr.mxu0 0.0
    %210 = vmatpush1.msra.mxu0 0.0
    %211 = vmatprep.subr.mxu0 0.0
    %212 = vmatpush1.msra.mxu0 0.0
    %213 = vmatprep.subr.mxu0 0.0
    %214 = vmatpush1.msra.mxu0 0.0
    %215 = vmatprep.subr.mxu0 0.0
    %216 = vmatpush1.msra.mxu0 0.0
    %217 = vmatprep.subr.mxu0 0.0
    %218 = vmatpush1.msra.mxu0 0.0
    %219 = vmatprep.subr.mxu0 0.0
    %220 = vmatpush1.msra.mxu0 0.0
    %221 = vmatprep.subr.mxu0 0.0
    %222 = vmatpush1.msra.mxu0 0.0
    %223 = vmatprep.mubr.f32.mxu0 0.0
    %224 = vmatmul.mubr.f32.gmra.mrb[0].mxu0 %v42
    %v225 = vpop.f32.mrb[0].mxu0
    %v226 = vadd.f32 0.0, %v225
    %v227 = vpop.f32.mrb[0].mxu0
    %228 = vmatprep.mubr.f32.mxu0 0.0
    %229 = vmatmul.mubr.f32.gmra.mrb[0].mxu0 %v43
    %v230 = vpop.f32.mrb[0].mxu0
    %v231 = vadd.f32 0.0, %v230
    %v232 = vpop.f32.mrb[0].mxu0
    %233 = vdwg.mxu0
    %v234 = vadd.f32 %v141, %v226
    %v235 = vadd.f32 %v142, %v231
    %236 = vst [vmem:[#allocation3] sm:$0xff] %v234
    %237 = vst [vmem:[#allocation3 + $0x8] sm:$0xff] %v235
    // Predicated region
    $region30: #{mlp_forward.6} parent=1 // pred_check
      %p238 = pneg %p34
    $region31: #{mlp_forward.6} parent=1 // pred_check_branch
      %240 = sbr.rel (%p238) target = $region33
    $region32: #{mlp_forward.6} parent=1 // pred_region
      %v241 = vld [vmem:[#allocation2] sm:$0xff]
      %v242 = vld [vmem:[#allocation2 + $0x8] sm:$0xff]
      %v243 = vld [vmem:[%s2] sm:$0x1]
      %v245 = vlaneseq
      %v246 = vshrl.u32 %v245, 7
      %v247 = vsub.s32 0, %v246
      %v248 = vrot.slane %v243, %v247
      %v250 = vadd.f32 %v241, %v248
      %v251 = vadd.f32 %v242, %v248
      %v252 = vld [vmem:[#allocation3] sm:$0xff]
      %v253 = vld [vmem:[#allocation3 + $0x8] sm:$0xff]
      %v254 = vld [vmem:[%s4] sm:$0x1]
      %v256 = vlaneseq
      %v257 = vshrl.u32 %v256, 7
      %v258 = vsub.s32 0, %v257
      %v259 = vrot.slane %v254, %v258
      %v261 = vadd.f32 %v252, %v259
      %v262 = vadd.f32 %v253, %v259
      %v263 = vsub.f32 0.0, %v250
      %v264 = vsub.f32 0.0, %v251
      %v265 = vmul.f32 %v263, 1.442695
      %v266 = vpow.pop %v265
      %v267 = vmul.f32 %v264, 1.442695
      %v268 = vpow.pop %v267
      %v269 = vadd.f32 %v266, 1.0
      %v270 = vadd.f32 %v268, 1.0
      %v271 = vrcp.pop %v269
      %v272 = vrcp.pop %v270
      %v273 = vmul.f32 %v250, %v271
      %v274 = vmul.f32 %v251, %v272
      %v275 = vsub.f32 0.0, %v261
      %v276 = vsub.f32 0.0, %v262
      %v277 = vmul.f32 %v275, 1.442695
      %v278 = vpow.pop %v277
      %v279 = vmul.f32 %v276, 1.442695
      %v280 = vpow.pop %v279
      %v281 = vadd.f32 %v278, 1.0
      %v282 = vadd.f32 %v280, 1.0
      %v283 = vrcp.pop %v281
      %v284 = vrcp.pop %v282
      %v285 = vmul.f32 %v273, %v283
      %v286 = vmul.f32 %v274, %v284
      %287 = vst [vmem:[%s5] sm:$0xff] %v285
      %288 = vst [vmem:[%s5 + $0x8] sm:$0xff] %v286
    $region33: #{mlp_forward.6} parent=1 // pred_fallthru
      _
    // Predicated region
    $region34: #{mlp_forward.6} parent=1 // pred_check
      _
    $region35: #{mlp_forward.6} parent=1 // pred_check_branch
      %290 = sbr.rel (0) target = $region37
    $region36: #{mlp_forward.6} parent=1 // pred_region
      _
    $region37: #{mlp_forward.6} parent=1 // pred_fallthru
      _
    // Predicated region
    $region38: #{mlp_forward.6} parent=1 // pred_check
      _
    $region39: #{mlp_forward.6} parent=1 // pred_check_branch
      %292 = sbr.rel (0) target = $region41
    $region40: #{mlp_forward.6} parent=1 // pred_region
      _
    $region41: #{mlp_forward.6} parent=1 // pred_fallthru
      _
    %293 = vsyncpa [#allocation5], 1

// kernel: mlp_forward.8
$region0: #{mlp_forward.8}
  #allocation0 [shape = 'u32[]', space=smem, size = 0x4, offset = 0x4, fixed_abs, tag = 'smem constant byte address 0x4 - core index']
  #allocation1 [shape = 'u32[144,128]{1,0:T(1,128)}', space=vmem, size = 0x12000, scoped, tag = 'internal scratch']
  #allocation2 [shape = 'f32[16,128]{1,0:T(8,128)}', space=vmem, size = 0x2000, scoped, tag = 'scratch operand']
  #allocation3 [shape = 'f32[16,128]{1,0:T(8,128)}', space=vmem, size = 0x2000, scoped, tag = 'scratch operand']
  %s0 = inlined_call_operand.vmem [shape: f32[16,128], index: 0, kind: input, shape index: {}]
  %s1 = inlined_call_operand.vmem [shape: f32[128,128], index: 1, kind: input, shape index: {}]
  %s2 = inlined_call_operand.vmem [shape: f32[1,128], index: 2, kind: input, shape index: {}]
  %s3 = inlined_call_operand.vmem [shape: f32[128,128], index: 3, kind: input, shape index: {}]
  %s4 = inlined_call_operand.vmem [shape: f32[1,128], index: 4, kind: input, shape index: {}]
  %s5 = inlined_call_operand.vmem [shape: f32[16,128], index: 5, kind: output, shape index: {}]
  %s6 = sld [smem:[#allocation0]]
  $region38: #{mlp_forward.8} parent=0
    _
  %s8 = ssub.s32 1, %s6
  %s9 = scalar_select 0, %s8, %s6
  // Predicated region
  $region2: #{mlp_forward.8} parent=0 // pred_check
    _
  $region3: #{mlp_forward.8} parent=0 // pred_check_branch
    %11 = sbr.rel (0) target = $region5
  $region4: #{mlp_forward.8} parent=0 // pred_region
    _
  $region5: #{mlp_forward.8} parent=0 // pred_fallthru
    _
  // Predicated region
  $region6: #{mlp_forward.8} parent=0 // pred_check
    _
  $region7: #{mlp_forward.8} parent=0 // pred_check_branch
    %13 = sbr.rel (0) target = $region9
  $region8: #{mlp_forward.8} parent=0 // pred_region
    _
  $region9: #{mlp_forward.8} parent=0 // pred_fallthru
    _
  // Predicated region
  $region10: #{mlp_forward.8} parent=0 // pred_check
    _
  $region11: #{mlp_forward.8} parent=0 // pred_check_branch
    %15 = sbr.rel (0) target = $region13
  $region12: #{mlp_forward.8} parent=0 // pred_region
    _
  $region13: #{mlp_forward.8} parent=0 // pred_fallthru
    _
  // Predicated region
  $region14: #{mlp_forward.8} parent=0 // pred_check
    _
  $region15: #{mlp_forward.8} parent=0 // pred_check_branch
    %17 = sbr.rel (0) target = $region17
  $region16: #{mlp_forward.8} parent=0 // pred_region
    _
  $region17: #{mlp_forward.8} parent=0 // pred_fallthru
    _
  // Predicated region
  $region18: #{mlp_forward.8} parent=0 // pred_check
    _
  $region19: #{mlp_forward.8} parent=0 // pred_check_branch
    %19 = sbr.rel (0) target = $region21
  $region20: #{mlp_forward.8} parent=0 // pred_region
    _
  $region21: #{mlp_forward.8} parent=0 // pred_fallthru
    _
  %p20 = scmp.eq.s32.totalorder 0, 0
  // Predicated region
  $region22: #{mlp_forward.8} parent=0 // pred_check
    %p21 = pneg %p20
  $region23: #{mlp_forward.8} parent=0 // pred_check_branch
    %23 = sbr.rel (%p21) target = $region25
  $region24: #{mlp_forward.8} parent=0 // pred_region
    %24 = vst [vmem:[#allocation2] sm:$0xff] 0.0
    %25 = vst [vmem:[#allocation2 + $0x8] sm:$0xff] 0.0
    %26 = vst [vmem:[#allocation3] sm:$0xff] 0.0
    %27 = vst [vmem:[#allocation3 + $0x8] sm:$0xff] 0.0
  $region25: #{mlp_forward.8} parent=0 // pred_fallthru
    _
  %v28 = vld [vmem:[%s0] sm:$0xff]
  %v29 = vld [vmem:[%s0 + $0x8] sm:$0xff]
  %v30 = vld [vmem:[#allocation2] sm:$0xff]
  %v31 = vld [vmem:[#allocation2 + $0x8] sm:$0xff]
  %v32 = vld [vmem:[%s1] sm:$0xff]
  %v33 = vld [vmem:[%s1 + $0x8] sm:$0xff]
  %v34 = vld [vmem:[%s1 + $0x10] sm:$0xff]
  %v35 = vld [vmem:[%s1 + $0x18] sm:$0xff]
  %v36 = vld [vmem:[%s1 + $0x20] sm:$0xff]
  %v37 = vld [vmem:[%s1 + $0x28] sm:$0xff]
  %v38 = vld [vmem:[%s1 + $0x30] sm:$0xff]
  %v39 = vld [vmem:[%s1 + $0x38] sm:$0xff]
  %v40 = vld [vmem:[%s1 + $0x40] sm:$0xff]
  %v41 = vld [vmem:[%s1 + $0x48] sm:$0xff]
  %v42 = vld [vmem:[%s1 + $0x50] sm:$0xff]
  %v43 = vld [vmem:[%s1 + $0x58] sm:$0xff]
  %v44 = vld [vmem:[%s1 + $0x60] sm:$0xff]
  %v45 = vld [vmem:[%s1 + $0x68] sm:$0xff]
  %v46 = vld [vmem:[%s1 + $0x70] sm:$0xff]
  %v47 = vld [vmem:[%s1 + $0x78] sm:$0xff]
  %48 = vmatprep.subr.mxu0 0.0
  %49 = vmatpush1.msra.mxu0 %v32
  %50 = vmatprep.subr.mxu0 0.0
  %51 = vmatpush1.msra.mxu0 %v33
  %52 = vmatprep.subr.mxu0 0.0
  %53 = vmatpush1.msra.mxu0 %v34
  %54 = vmatprep.subr.mxu0 0.0
  %55 = vmatpush1.msra.mxu0 %v35
  %56 = vmatprep.subr.mxu0 0.0
  %57 = vmatpush1.msra.mxu0 %v36
  %58 = vmatprep.subr.mxu0 0.0
  %59 = vmatpush1.msra.mxu0 %v37
  %60 = vmatprep.subr.mxu0 0.0
  %61 = vmatpush1.msra.mxu0 %v38
  %62 = vmatprep.subr.mxu0 0.0
  %63 = vmatpush1.msra.mxu0 %v39
  %64 = vmatprep.subr.mxu0 0.0
  %65 = vmatpush1.msra.mxu0 %v40
  %66 = vmatprep.subr.mxu0 0.0
  %67 = vmatpush1.msra.mxu0 %v41
  %68 = vmatprep.subr.mxu0 0.0
  %69 = vmatpush1.msra.mxu0 %v42
  %70 = vmatprep.subr.mxu0 0.0
  %71 = vmatpush1.msra.mxu0 %v43
  %72 = vmatprep.subr.mxu0 0.0
  %73 = vmatpush1.msra.mxu0 %v44
  %74 = vmatprep.subr.mxu0 0.0
  %75 = vmatpush1.msra.mxu0 %v45
  %76 = vmatprep.subr.mxu0 0.0
  %77 = vmatpush1.msra.mxu0 %v46
  %78 = vmatprep.subr.mxu0 0.0
  %79 = vmatpush1.msra.mxu0 %v47
  %80 = vmatprep.subr.mxu0 0.0
  %81 = vmatpush1.msra.mxu0 0.0
  %82 = vmatprep.subr.mxu0 0.0
  %83 = vmatpush1.msra.mxu0 0.0
  %84 = vmatprep.subr.mxu0 0.0
  %85 = vmatpush1.msra.mxu0 0.0
  %86 = vmatprep.subr.mxu0 0.0
  %87 = vmatpush1.msra.mxu0 0.0
  %88 = vmatprep.subr.mxu0 0.0
  %89 = vmatpush1.msra.mxu0 0.0
  %90 = vmatprep.subr.mxu0 0.0
  %91 = vmatpush1.msra.mxu0 0.0
  %92 = vmatprep.subr.mxu0 0.0
  %93 = vmatpush1.msra.mxu0 0.0
  %94 = vmatprep.subr.mxu0 0.0
  %95 = vmatpush1.msra.mxu0 0.0
  %96 = vmatprep.subr.mxu0 0.0
  %97 = vmatpush1.msra.mxu0 0.0
  %98 = vmatprep.subr.mxu0 0.0
  %99 = vmatpush1.msra.mxu0 0.0
  %100 = vmatprep.subr.mxu0 0.0
  %101 = vmatpush1.msra.mxu0 0.0
  %102 = vmatprep.subr.mxu0 0.0
  %103 = vmatpush1.msra.mxu0 0.0
  %104 = vmatprep.subr.mxu0 0.0
  %105 = vmatpush1.msra.mxu0 0.0
  %106 = vmatprep.subr.mxu0 0.0
  %107 = vmatpush1.msra.mxu0 0.0
  %108 = vmatprep.subr.mxu0 0.0
  %109 = vmatpush1.msra.mxu0 0.0
  %110 = vmatprep.subr.mxu0 0.0
  %111 = vmatpush1.msra.mxu0 0.0
  %112 = vmatprep.mubr.f32.mxu0 0.0
  %113 = vmatmul.mubr.f32.gmra.mrb[0].mxu0 %v28
  %v114 = vpop.f32.mrb[0].mxu0
  %v115 = vadd.f32 0.0, %v114
  %v116 = vpop.f32.mrb[0].mxu0
  %117 = vmatprep.mubr.f32.mxu0 0.0
  %118 = vmatmul.mubr.f32.gmra.mrb[0].mxu0 %v29
  %v119 = vpop.f32.mrb[0].mxu0
  %v120 = vadd.f32 0.0, %v119
  %v121 = vpop.f32.mrb[0].mxu0
  %122 = vdwg.mxu0
  %v123 = vadd.f32 %v30, %v115
  %v124 = vadd.f32 %v31, %v120
  %125 = vst [vmem:[#allocation2] sm:$0xff] %v123
  %126 = vst [vmem:[#allocation2 + $0x8] sm:$0xff] %v124
  %v127 = vld [vmem:[#allocation3] sm:$0xff]
  %v128 = vld [vmem:[#allocation3 + $0x8] sm:$0xff]
  %v129 = vld [vmem:[%s3] sm:$0xff]
  %v130 = vld [vmem:[%s3 + $0x8] sm:$0xff]
  %v131 = vld [vmem:[%s3 + $0x10] sm:$0xff]
  %v132 = vld [vmem:[%s3 + $0x18] sm:$0xff]
  %v133 = vld [vmem:[%s3 + $0x20] sm:$0xff]
  %v134 = vld [vmem:[%s3 + $0x28] sm:$0xff]
  %v135 = vld [vmem:[%s3 + $0x30] sm:$0xff]
  %v136 = vld [vmem:[%s3 + $0x38] sm:$0xff]
  %v137 = vld [vmem:[%s3 + $0x40] sm:$0xff]
  %v138 = vld [vmem:[%s3 + $0x48] sm:$0xff]
  %v139 = vld [vmem:[%s3 + $0x50] sm:$0xff]
  %v140 = vld [vmem:[%s3 + $0x58] sm:$0xff]
  %v141 = vld [vmem:[%s3 + $0x60] sm:$0xff]
  %v142 = vld [vmem:[%s3 + $0x68] sm:$0xff]
  %v143 = vld [vmem:[%s3 + $0x70] sm:$0xff]
  %v144 = vld [vmem:[%s3 + $0x78] sm:$0xff]
  %145 = vmatprep.subr.mxu0 0.0
  %146 = vmatpush1.msra.mxu0 %v129
  %147 = vmatprep.subr.mxu0 0.0
  %148 = vmatpush1.msra.mxu0 %v130
  %149 = vmatprep.subr.mxu0 0.0
  %150 = vmatpush1.msra.mxu0 %v131
  %151 = vmatprep.subr.mxu0 0.0
  %152 = vmatpush1.msra.mxu0 %v132
  %153 = vmatprep.subr.mxu0 0.0
  %154 = vmatpush1.msra.mxu0 %v133
  %155 = vmatprep.subr.mxu0 0.0
  %156 = vmatpush1.msra.mxu0 %v134
  %157 = vmatprep.subr.mxu0 0.0
  %158 = vmatpush1.msra.mxu0 %v135
  %159 = vmatprep.subr.mxu0 0.0
  %160 = vmatpush1.msra.mxu0 %v136
  %161 = vmatprep.subr.mxu0 0.0
  %162 = vmatpush1.msra.mxu0 %v137
  %163 = vmatprep.subr.mxu0 0.0
  %164 = vmatpush1.msra.mxu0 %v138
  %165 = vmatprep.subr.mxu0 0.0
  %166 = vmatpush1.msra.mxu0 %v139
  %167 = vmatprep.subr.mxu0 0.0
  %168 = vmatpush1.msra.mxu0 %v140
  %169 = vmatprep.subr.mxu0 0.0
  %170 = vmatpush1.msra.mxu0 %v141
  %171 = vmatprep.subr.mxu0 0.0
  %172 = vmatpush1.msra.mxu0 %v142
  %173 = vmatprep.subr.mxu0 0.0
  %174 = vmatpush1.msra.mxu0 %v143
  %175 = vmatprep.subr.mxu0 0.0
  %176 = vmatpush1.msra.mxu0 %v144
  %177 = vmatprep.subr.mxu0 0.0
  %178 = vmatpush1.msra.mxu0 0.0
  %179 = vmatprep.subr.mxu0 0.0
  %180 = vmatpush1.msra.mxu0 0.0
  %181 = vmatprep.subr.mxu0 0.0
  %182 = vmatpush1.msra.mxu0 0.0
  %183 = vmatprep.subr.mxu0 0.0
  %184 = vmatpush1.msra.mxu0 0.0
  %185 = vmatprep.subr.mxu0 0.0
  %186 = vmatpush1.msra.mxu0 0.0
  %187 = vmatprep.subr.mxu0 0.0
  %188 = vmatpush1.msra.mxu0 0.0
  %189 = vmatprep.subr.mxu0 0.0
  %190 = vmatpush1.msra.mxu0 0.0
  %191 = vmatprep.subr.mxu0 0.0
  %192 = vmatpush1.msra.mxu0 0.0
  %193 = vmatprep.subr.mxu0 0.0
  %194 = vmatpush1.msra.mxu0 0.0
  %195 = vmatprep.subr.mxu0 0.0
  %196 = vmatpush1.msra.mxu0 0.0
  %197 = vmatprep.subr.mxu0 0.0
  %198 = vmatpush1.msra.mxu0 0.0
  %199 = vmatprep.subr.mxu0 0.0
  %200 = vmatpush1.msra.mxu0 0.0
  %201 = vmatprep.subr.mxu0 0.0
  %202 = vmatpush1.msra.mxu0 0.0
  %203 = vmatprep.subr.mxu0 0.0
  %204 = vmatpush1.msra.mxu0 0.0
  %205 = vmatprep.subr.mxu0 0.0
  %206 = vmatpush1.msra.mxu0 0.0
  %207 = vmatprep.subr.mxu0 0.0
  %208 = vmatpush1.msra.mxu0 0.0
  %209 = vmatprep.mubr.f32.mxu0 0.0
  %210 = vmatmul.mubr.f32.gmra.mrb[0].mxu0 %v28
  %v211 = vpop.f32.mrb[0].mxu0
  %v212 = vadd.f32 0.0, %v211
  %v213 = vpop.f32.mrb[0].mxu0
  %214 = vmatprep.mubr.f32.mxu0 0.0
  %215 = vmatmul.mubr.f32.gmra.mrb[0].mxu0 %v29
  %v216 = vpop.f32.mrb[0].mxu0
  %v217 = vadd.f32 0.0, %v216
  %v218 = vpop.f32.mrb[0].mxu0
  %219 = vdwg.mxu0
  %v220 = vadd.f32 %v127, %v212
  %v221 = vadd.f32 %v128, %v217
  %222 = vst [vmem:[#allocation3] sm:$0xff] %v220
  %223 = vst [vmem:[#allocation3 + $0x8] sm:$0xff] %v221
  // Predicated region
  $region26: #{mlp_forward.8} parent=0 // pred_check
    %p224 = pneg %p20
  $region27: #{mlp_forward.8} parent=0 // pred_check_branch
    %226 = sbr.rel (%p224) target = $region29
  $region28: #{mlp_forward.8} parent=0 // pred_region
    %v227 = vld [vmem:[#allocation2] sm:$0xff]
    %v228 = vld [vmem:[#allocation2 + $0x8] sm:$0xff]
    %v229 = vld [vmem:[%s2] sm:$0x1]
    %v231 = vlaneseq
    %v232 = vshrl.u32 %v231, 7
    %v233 = vsub.s32 0, %v232
    %v234 = vrot.slane %v229, %v233
    %v236 = vadd.f32 %v227, %v234
    %v237 = vadd.f32 %v228, %v234
    %v238 = vld [vmem:[#allocation3] sm:$0xff]
    %v239 = vld [vmem:[#allocation3 + $0x8] sm:$0xff]
    %v240 = vld [vmem:[%s4] sm:$0x1]
    %v242 = vlaneseq
    %v243 = vshrl.u32 %v242, 7
    %v244 = vsub.s32 0, %v243
    %v245 = vrot.slane %v240, %v244
    %v247 = vadd.f32 %v238, %v245
    %v248 = vadd.f32 %v239, %v245
    %v249 = vsub.f32 0.0, %v236
    %v250 = vsub.f32 0.0, %v237
    %v251 = vmul.f32 %v249, 1.442695
    %v252 = vpow.pop %v251
    %v253 = vmul.f32 %v250, 1.442695
    %v254 = vpow.pop %v253
    %v255 = vadd.f32 %v252, 1.0
    %v256 = vadd.f32 %v254, 1.0
    %v257 = vrcp.pop %v255
    %v258 = vrcp.pop %v256
    %v259 = vmul.f32 %v236, %v257
    %v260 = vmul.f32 %v237, %v258
    %v261 = vsub.f32 0.0, %v247
    %v262 = vsub.f32 0.0, %v248
    %v263 = vmul.f32 %v261, 1.442695
    %v264 = vpow.pop %v263
    %v265 = vmul.f32 %v262, 1.442695
    %v266 = vpow.pop %v265
    %v267 = vadd.f32 %v264, 1.0
    %v268 = vadd.f32 %v266, 1.0
    %v269 = vrcp.pop %v267
    %v270 = vrcp.pop %v268
    %v271 = vmul.f32 %v259, %v269
    %v272 = vmul.f32 %v260, %v270
    %273 = vst [vmem:[%s5] sm:$0xff] %v271
    %274 = vst [vmem:[%s5 + $0x8] sm:$0xff] %v272
  $region29: #{mlp_forward.8} parent=0 // pred_fallthru
    _
  // Predicated region
  $region30: #{mlp_forward.8} parent=0 // pred_check
    _
  $region31: #{mlp_forward.8} parent=0 // pred_check_branch
    %276 = sbr.rel (0) target = $region33
  $region32: #{mlp_forward.8} parent=0 // pred_region
    _
  $region33: #{mlp_forward.8} parent=0 // pred_fallthru
    _
  // Predicated region
  $region34: #{mlp_forward.8} parent=0 // pred_check
    _
  $region35: #{mlp_forward.8} parent=0 // pred_check_branch
    %278 = sbr.rel (0) target = $region37
  $region36: #{mlp_forward.8} parent=0 // pred_region
    _
  $region37: #{mlp_forward.8} parent=0 // pred_fallthru
    _

</llo_original>
